<compile_context>
chip_gen: v7x
topology: tpu7x:2x2x1
jax: 0.10.0
libtpu: 0.0.40
codegen_flags: <defaults>
</compile_context>

<pallas_src>
import jax
import jax.numpy as jnp
import numpy as np
from jax import lax
from jax.experimental import pallas as pl
from jax.experimental.pallas import tpu as pltpu


def _bilstm_recurrence_kernel(gx_ref, whh_ref, out_ref):
    """Fused bidirectional LSTM recurrence (single grid step).

    gx_ref:  (T, B, 8H) f32  precomputed x @ W_ih + (b_ih + b_hh); column
                             layout g*2H + d*H + j (gate-major, dir-minor);
                             backward direction already time-reversed.
    whh_ref: (2H, 8H)  f32   block-diagonal recurrent weights, rows [h_fwd|h_bwd].
    out_ref: (T, B, 2H)      out[s, :, :H] = forward hidden at time s,
                             out[s, :, H:] = backward hidden at time s
                             (both halves written time-ordered by the kernel).
    """
    T = gx_ref.shape[0]
    B = gx_ref.shape[1]
    H8 = gx_ref.shape[2]                  # 8H
    H2 = H8 // 4                          # 2H  (fused [fwd | bwd] hidden width)
    H = H2 // 2

    w = whh_ref[...]                      # hoisted: read recurrent weights once

    # Lane mask for the second 128-lane tile [g | o]: lanes < 2H -> tanh(g),
    # else sigmoid(o).  Hoisted outside the loop (broadcasts are not CSE'd).
    lane = lax.broadcasted_iota(jnp.int32, (B, 2 * H2), 1)
    g_mask = lane < H2

    def step(t, carry):
        h, c = carry                      # (B, 2H) each, live in vregs
        # One lane-dense MXU op per timestep: (B, 2H) @ (2H, 8H) -> (B, 8H).
        pre = gx_ref[t] + jnp.dot(h, w, preferred_element_type=jnp.float32)

        # Tile 1 (lanes 0:4H)  = [i | f] : single fused sigmoid.
        if_act = jax.nn.sigmoid(pre[:, 0:2 * H2])
        # Tile 2 (lanes 4H:8H) = [g | o] : full-tile tanh + sigmoid, lane-select
        # (EUP has slack; avoids 64-lane masked sub-vreg activation dispatches).
        t2 = pre[:, 2 * H2:4 * H2]
        go_act = jnp.where(g_mask, jnp.tanh(t2), jax.nn.sigmoid(t2))

        i_g = if_act[:, :H2]
        f_g = if_act[:, H2:]
        g_g = go_act[:, :H2]
        o_g = go_act[:, H2:]

        c_new = f_g * c + i_g * g_g
        h_new = o_g * jnp.tanh(c_new)

        # Forward half -> time t ; backward half -> time T-1-t (time-ordered),
        # so the wrapper needs no flip/concat afterwards.
        out_ref[t, :, 0:H] = h_new[:, 0:H].astype(out_ref.dtype)
        out_ref[T - 1 - t, :, H:2 * H] = h_new[:, H:2 * H].astype(out_ref.dtype)
        return (h_new, c_new)

    zeros = jnp.zeros((B, H2), jnp.float32)
    # Short static trip count -> full unroll for LLO scheduling visibility;
    # the (h, c) carry stays register-allocated across the unrolled steps.
    lax.fori_loop(0, T, step, (zeros, zeros), unroll=True)


def pack_lstm_params(w_ih, w_hh, b):
    """Pre-pack LSTM parameters ONCE, outside the per-call path.

    w_ih: (2, 4, D, H)   b: (2, 4, H) (= b_ih + b_hh)   w_hh: (2, 4, H, H)
    Returns:
      w_in : (D, 8H)  input-projection weights, column order g*2H + d*H + j
      b_in : (8H,)    fused bias, same column order
      w_blk: (2H, 8H) block-diagonal recurrent weights, rows [h_fwd | h_bwd]
    """
    f32 = jnp.float32
    D, H = w_ih.shape[2], w_ih.shape[3]

    # Columns ordered (gate, dir, j) -> lane-dense 8H.
    w_in = jnp.transpose(w_ih.astype(f32), (2, 1, 0, 3)).reshape(D, 8 * H)
    b_in = jnp.transpose(b.astype(f32), (1, 0, 2)).reshape(8 * H)

    # Block-diagonal recurrent matrix: rows (dir, k), cols (gate, dir, j).
    zeros = jnp.zeros((H, 4, H), f32)
    w0 = jnp.transpose(w_hh[0].astype(f32), (1, 0, 2))     # (k, g, j)
    w1 = jnp.transpose(w_hh[1].astype(f32), (1, 0, 2))
    blk0 = jnp.stack([w0, zeros], axis=2)                  # (H, 4, 2, H), d=0 block
    blk1 = jnp.stack([zeros, w1], axis=2)                  # (H, 4, 2, H), d=1 block
    w_blk = jnp.concatenate([blk0, blk1], axis=0).reshape(2 * H, 8 * H)
    return w_in, b_in, w_blk


def each_repr_lstm_forward(x, w_in, b_in, w_blk):
    """x: (B, T, D) f32; packed params from pack_lstm_params.

    Returns (B, T, 2*H) f32, matching
    torch.nn.LSTM(batch_first=True, bidirectional=True) output.
    """
    B, T, D = x.shape
    H8 = w_in.shape[1]
    H = H8 // 8
    f32 = jnp.float32

    # ---- Single dense input projection (lane-dense gx) ----------------------
    x_tbd = jnp.transpose(x.astype(f32), (1, 0, 2))                  # (T, B, D)
    gx = (x_tbd.reshape(T * B, D) @ w_in + b_in).reshape(T, B, H8)   # (T, B, 8H)
    # Time-reverse only the backward-direction columns so that kernel step t
    # consumes x[t] for the forward half and x[T-1-t] for the backward half.
    gx5 = gx.reshape(T, B, 4, 2, H)
    gx = jnp.concatenate([gx5[:, :, :, 0:1, :], gx5[::-1, :, :, 1:2, :]],
                         axis=3).reshape(T, B, H8)

    out = pl.pallas_call(
        _bilstm_recurrence_kernel,
        out_shape=jax.ShapeDtypeStruct((T, B, 2 * H), jnp.float32),
        grid=(1,),
        in_specs=[
            pl.BlockSpec((T, B, H8), lambda i: (0, 0, 0)),
            pl.BlockSpec((2 * H, H8), lambda i: (0, 0)),
        ],
        out_specs=pl.BlockSpec((T, B, 2 * H), lambda i: (0, 0, 0)),
        compiler_params=pltpu.CompilerParams(
            dimension_semantics=("arbitrary",)),
    )(gx, w_blk)

    # Both halves are already time-ordered by the kernel; only a layout
    # transpose back to batch_first remains.
    return jnp.transpose(out, (1, 0, 2))                             # (B, T, 2H)


def _lstm_reference(x, w_ih, w_hh, b):
    """Pure-JAX reference of a 1-layer bidirectional LSTM (PyTorch semantics)."""
    B, T, D = x.shape
    H = w_ih.shape[-1]
    x_tbd = jnp.transpose(x, (1, 0, 2))  # (T, B, D)

    def run(d, seq):
        def step(carry, xt):
            h, c = carry
            pre = [xt @ w_ih[d, g] + h @ w_hh[d, g] + b[d, g] for g in range(4)]
            i_g = jax.nn.sigmoid(pre[0])
            f_g = jax.nn.sigmoid(pre[1])
            g_g = jnp.tanh(pre[2])
            o_g = jax.nn.sigmoid(pre[3])
            c = f_g * c + i_g * g_g
            h = o_g * jnp.tanh(c)
            return (h, c), h

        init = (jnp.zeros((B, H), jnp.float32), jnp.zeros((B, H), jnp.float32))
        _, hs = lax.scan(step, init, seq)
        return hs  # (T, B, H)

    hs_f = run(0, x_tbd)
    hs_b = run(1, x_tbd[::-1])[::-1]
    return jnp.transpose(jnp.concatenate([hs_f, hs_b], axis=-1), (1, 0, 2))


if __name__ == "__main__":
    # Small shapes consistent with the module: batch=2, seq=8, input_dim=16,
    # output_dim (hidden) = 32, bidirectional, 1 layer.
    B, T, D, H = 2, 8, 16, 32

    key = jax.random.PRNGKey(0)
    k_x, k_wih, k_whh, k_bih, k_bhh = jax.random.split(key, 5)

    # PyTorch-style uniform(-1/sqrt(H), 1/sqrt(H)) init.
    scale = 1.0 / np.sqrt(H)
    # (dir, gate, in, out) layouts; gate order matches PyTorch: i, f, g, o.
    w_ih = jax.random.uniform(k_wih, (2, 4, D, H), jnp.float32, -scale, scale)
    w_hh = jax.random.uniform(k_whh, (2, 4, H, H), jnp.float32, -scale, scale)
    b_ih = jax.random.uniform(k_bih, (2, 4, H), jnp.float32, -scale, scale)
    b_hh = jax.random.uniform(k_bhh, (2, 4, H), jnp.float32, -scale, scale)
    b = b_ih + b_hh  # PyTorch adds both biases in the gate pre-activation.

    x = jax.random.normal(k_x, (B, T, D), jnp.float32)

    # Parameter packing is done once, outside the per-call path.
    w_in, b_in, w_blk = pack_lstm_params(w_ih, w_hh, b)

    fwd = jax.jit(each_repr_lstm_forward)
    y = jax.block_until_ready(fwd(x, w_in, b_in, w_blk))

    y_ref = jax.block_until_ready(_lstm_reference(x, w_ih, w_hh, b))
    assert y.shape == (B, T, 2 * H), y.shape
    np.testing.assert_allclose(np.asarray(y), np.asarray(y_ref),
                               rtol=1e-4, atol=1e-4)

    # TODO(synk): variable-length / packed-sequence inputs (pack_padded_sequence)
    # are not handled; fixed-length dense batches only, as in this forward().

    print("KERNEL_OK")
</pallas_src>

<mosaic_0001>
module attributes {stable_mosaic.version = 11 : i64} {
  func.func @_bilstm_recurrence_kernel(%arg0: i32, %arg1: memref<8x2x256xf32, #tpu.memory_space<vmem>>, %arg2: memref<64x256xf32, #tpu.memory_space<vmem>>, %arg3: memref<8x2x64xf32, #tpu.memory_space<vmem>>) attributes {dimension_semantics = [#tpu.dimension_semantics<arbitrary>], iteration_bounds = array<i64: 1>, scalar_prefetch = 0 : i64, scratch_operands = 0 : i64, tpu.core_type = #tpu.core_type<tc>, window_params = [{pipeline_mode = #tpu.pipeline_mode<synchronous>, transform_indices = @transform_0, window_bounds = array<i64: 8, 2, 256>}, {pipeline_mode = #tpu.pipeline_mode<synchronous>, transform_indices = @transform_1, window_bounds = array<i64: 64, 256>}, {pipeline_mode = #tpu.pipeline_mode<synchronous>, transform_indices = @transform_2, window_bounds = array<i64: 8, 2, 64>}]} {
    %c0 = arith.constant 0 : index
    %c0_0 = arith.constant 0 : index
    %0 = vector.load %arg2[%c0, %c0_0] : memref<64x256xf32, #tpu.memory_space<vmem>>, vector<64x256xf32>
    %1 = tpu.iota {dimensions = array<i32: 1>} : vector<2x128xi32>
    %c64_i32 = arith.constant 64 : i32
    %2 = vector.broadcast %c64_i32 : i32 to vector<2x128xi32>
    %3 = arith.cmpi slt, %1, %2 : vector<2x128xi32>
    %cst = arith.constant 0.000000e+00 : f32
    %4 = vector.broadcast %cst : f32 to vector<2x64xf32>
    %c0_i32 = arith.constant 0 : i32
    %5 = arith.index_cast %c0_i32 : i32 to index
    %c0_1 = arith.constant 0 : index
    %c0_2 = arith.constant 0 : index
    %6 = vector.load %arg1[%5, %c0_1, %c0_2] : memref<8x2x256xf32, #tpu.memory_space<vmem>>, vector<1x2x256xf32>
    %7 = vector.shape_cast %6 : vector<1x2x256xf32> to vector<2x256xf32>
    %cst_3 = arith.constant dense<0.000000e+00> : vector<2x256xf32>
    %8 = tpu.matmul %4, %0, %cst_3 {dimension_numbers = #tpu.dot_dimension_numbers<[1], [0], [0], [1], [0, 0, 1, 1], [], []>} : vector<2x64xf32>, vector<64x256xf32>, vector<2x256xf32> -> vector<2x256xf32>
    %9 = arith.addf %7, %8 : vector<2x256xf32>
    %10 = vector.extract_strided_slice %9 {offsets = [0, 0], sizes = [2, 128], strides = [1, 1]} : vector<2x256xf32> to vector<2x128xf32>
    %11 = arith.negf %10 : vector<2x128xf32>
    %12 = math.exp %11 : vector<2x128xf32>
    %cst_4 = arith.constant 1.000000e+00 : f32
    %13 = vector.broadcast %cst_4 : f32 to vector<2x128xf32>
    %14 = arith.addf %13, %12 : vector<2x128xf32>
    %15 = arith.divf %13, %14 : vector<2x128xf32>
    %16 = vector.extract_strided_slice %9 {offsets = [0, 128], sizes = [2, 128], strides = [1, 1]} : vector<2x256xf32> to vector<2x128xf32>
    %17 = math.tanh %16 : vector<2x128xf32>
    %18 = arith.negf %16 : vector<2x128xf32>
    %19 = math.exp %18 : vector<2x128xf32>
    %cst_5 = arith.constant 1.000000e+00 : f32
    %20 = vector.broadcast %cst_5 : f32 to vector<2x128xf32>
    %21 = arith.addf %20, %19 : vector<2x128xf32>
    %22 = arith.divf %20, %21 : vector<2x128xf32>
    %23 = arith.select %3, %17, %22 : vector<2x128xi1>, vector<2x128xf32>
    %24 = vector.extract_strided_slice %15 {offsets = [0, 0], sizes = [2, 64], strides = [1, 1]} : vector<2x128xf32> to vector<2x64xf32>
    %25 = vector.extract_strided_slice %15 {offsets = [0, 64], sizes = [2, 64], strides = [1, 1]} : vector<2x128xf32> to vector<2x64xf32>
    %26 = vector.extract_strided_slice %23 {offsets = [0, 0], sizes = [2, 64], strides = [1, 1]} : vector<2x128xf32> to vector<2x64xf32>
    %27 = vector.extract_strided_slice %23 {offsets = [0, 64], sizes = [2, 64], strides = [1, 1]} : vector<2x128xf32> to vector<2x64xf32>
    %28 = arith.mulf %25, %4 : vector<2x64xf32>
    %29 = arith.mulf %24, %26 : vector<2x64xf32>
    %30 = arith.addf %28, %29 : vector<2x64xf32>
    %31 = math.tanh %30 : vector<2x64xf32>
    %32 = arith.mulf %27, %31 : vector<2x64xf32>
    %33 = vector.extract_strided_slice %32 {offsets = [0, 0], sizes = [2, 32], strides = [1, 1]} : vector<2x64xf32> to vector<2x32xf32>
    %34 = arith.index_cast %c0_i32 : i32 to index
    %c0_6 = arith.constant 0 : index
    %c0_7 = arith.constant 0 : index
    %35 = vector.load %arg3[%34, %c0_6, %c0_7] : memref<8x2x64xf32, #tpu.memory_space<vmem>>, vector<1x2x32xf32>
    %36 = vector.shape_cast %35 : vector<1x2x32xf32> to vector<2x32xf32>
    %37 = vector.shape_cast %33 : vector<2x32xf32> to vector<1x2x32xf32>
    tpu.vector_store %arg3[%34, %c0_6, %c0_7], %37 {strides = array<i32>} : memref<8x2x64xf32, #tpu.memory_space<vmem>>, vector<1x2x32xf32>,
    %38 = vector.extract_strided_slice %32 {offsets = [0, 32], sizes = [2, 32], strides = [1, 1]} : vector<2x64xf32> to vector<2x32xf32>
    %c7_i32 = arith.constant 7 : i32
    %39 = arith.subi %c7_i32, %c0_i32 : i32
    %40 = arith.index_cast %39 : i32 to index
    %c0_8 = arith.constant 0 : index
    %c32 = arith.constant 32 : index
    %41 = vector.load %arg3[%40, %c0_8, %c32] : memref<8x2x64xf32, #tpu.memory_space<vmem>>, vector<1x2x32xf32>
    %42 = vector.shape_cast %41 : vector<1x2x32xf32> to vector<2x32xf32>
    %43 = vector.shape_cast %38 : vector<2x32xf32> to vector<1x2x32xf32>
    tpu.vector_store %arg3[%40, %c0_8, %c32], %43 {strides = array<i32>} : memref<8x2x64xf32, #tpu.memory_space<vmem>>, vector<1x2x32xf32>,
    %c1_i32 = arith.constant 1 : i32
    %44 = arith.index_cast %c1_i32 : i32 to index
    %c0_9 = arith.constant 0 : index
    %c0_10 = arith.constant 0 : index
    %45 = vector.load %arg1[%44, %c0_9, %c0_10] : memref<8x2x256xf32, #tpu.memory_space<vmem>>, vector<1x2x256xf32>
    %46 = vector.shape_cast %45 : vector<1x2x256xf32> to vector<2x256xf32>
    %cst_11 = arith.constant dense<0.000000e+00> : vector<2x256xf32>
    %47 = tpu.matmul %32, %0, %cst_11 {dimension_numbers = #tpu.dot_dimension_numbers<[1], [0], [0], [1], [0, 0, 1, 1], [], []>} : vector<2x64xf32>, vector<64x256xf32>, vector<2x256xf32> -> vector<2x256xf32>
    %48 = arith.addf %46, %47 : vector<2x256xf32>
    %49 = vector.extract_strided_slice %48 {offsets = [0, 0], sizes = [2, 128], strides = [1, 1]} : vector<2x256xf32> to vector<2x128xf32>
    %50 = arith.negf %49 : vector<2x128xf32>
    %51 = math.exp %50 : vector<2x128xf32>
    %cst_12 = arith.constant 1.000000e+00 : f32
    %52 = vector.broadcast %cst_12 : f32 to vector<2x128xf32>
    %53 = arith.addf %52, %51 : vector<2x128xf32>
    %54 = arith.divf %52, %53 : vector<2x128xf32>
    %55 = vector.extract_strided_slice %48 {offsets = [0, 128], sizes = [2, 128], strides = [1, 1]} : vector<2x256xf32> to vector<2x128xf32>
    %56 = math.tanh %55 : vector<2x128xf32>
    %57 = arith.negf %55 : vector<2x128xf32>
    %58 = math.exp %57 : vector<2x128xf32>
    %cst_13 = arith.constant 1.000000e+00 : f32
    %59 = vector.broadcast %cst_13 : f32 to vector<2x128xf32>
    %60 = arith.addf %59, %58 : vector<2x128xf32>
    %61 = arith.divf %59, %60 : vector<2x128xf32>
    %62 = arith.select %3, %56, %61 : vector<2x128xi1>, vector<2x128xf32>
    %63 = vector.extract_strided_slice %54 {offsets = [0, 0], sizes = [2, 64], strides = [1, 1]} : vector<2x128xf32> to vector<2x64xf32>
    %64 = vector.extract_strided_slice %54 {offsets = [0, 64], sizes = [2, 64], strides = [1, 1]} : vector<2x128xf32> to vector<2x64xf32>
    %65 = vector.extract_strided_slice %62 {offsets = [0, 0], sizes = [2, 64], strides = [1, 1]} : vector<2x128xf32> to vector<2x64xf32>
    %66 = vector.extract_strided_slice %62 {offsets = [0, 64], sizes = [2, 64], strides = [1, 1]} : vector<2x128xf32> to vector<2x64xf32>
    %67 = arith.mulf %64, %30 : vector<2x64xf32>
    %68 = arith.mulf %63, %65 : vector<2x64xf32>
    %69 = arith.addf %67, %68 : vector<2x64xf32>
    %70 = math.tanh %69 : vector<2x64xf32>
    %71 = arith.mulf %66, %70 : vector<2x64xf32>
    %72 = vector.extract_strided_slice %71 {offsets = [0, 0], sizes = [2, 32], strides = [1, 1]} : vector<2x64xf32> to vector<2x32xf32>
    %73 = arith.index_cast %c1_i32 : i32 to index
    %c0_14 = arith.constant 0 : index
    %c0_15 = arith.constant 0 : index
    %74 = vector.load %arg3[%73, %c0_14, %c0_15] : memref<8x2x64xf32, #tpu.memory_space<vmem>>, vector<1x2x32xf32>
    %75 = vector.shape_cast %74 : vector<1x2x32xf32> to vector<2x32xf32>
    %76 = vector.shape_cast %72 : vector<2x32xf32> to vector<1x2x32xf32>
    tpu.vector_store %arg3[%73, %c0_14, %c0_15], %76 {strides = array<i32>} : memref<8x2x64xf32, #tpu.memory_space<vmem>>, vector<1x2x32xf32>,
    %77 = vector.extract_strided_slice %71 {offsets = [0, 32], sizes = [2, 32], strides = [1, 1]} : vector<2x64xf32> to vector<2x32xf32>
    %c7_i32_16 = arith.constant 7 : i32
    %78 = arith.subi %c7_i32_16, %c1_i32 : i32
    %79 = arith.index_cast %78 : i32 to index
    %c0_17 = arith.constant 0 : index
    %c32_18 = arith.constant 32 : index
    %80 = vector.load %arg3[%79, %c0_17, %c32_18] : memref<8x2x64xf32, #tpu.memory_space<vmem>>, vector<1x2x32xf32>
    %81 = vector.shape_cast %80 : vector<1x2x32xf32> to vector<2x32xf32>
    %82 = vector.shape_cast %77 : vector<2x32xf32> to vector<1x2x32xf32>
    tpu.vector_store %arg3[%79, %c0_17, %c32_18], %82 {strides = array<i32>} : memref<8x2x64xf32, #tpu.memory_space<vmem>>, vector<1x2x32xf32>,
    %c2_i32 = arith.constant 2 : i32
    %83 = arith.index_cast %c2_i32 : i32 to index
    %c0_19 = arith.constant 0 : index
    %c0_20 = arith.constant 0 : index
    %84 = vector.load %arg1[%83, %c0_19, %c0_20] : memref<8x2x256xf32, #tpu.memory_space<vmem>>, vector<1x2x256xf32>
    %85 = vector.shape_cast %84 : vector<1x2x256xf32> to vector<2x256xf32>
    %cst_21 = arith.constant dense<0.000000e+00> : vector<2x256xf32>
    %86 = tpu.matmul %71, %0, %cst_21 {dimension_numbers = #tpu.dot_dimension_numbers<[1], [0], [0], [1], [0, 0, 1, 1], [], []>} : vector<2x64xf32>, vector<64x256xf32>, vector<2x256xf32> -> vector<2x256xf32>
    %87 = arith.addf %85, %86 : vector<2x256xf32>
    %88 = vector.extract_strided_slice %87 {offsets = [0, 0], sizes = [2, 128], strides = [1, 1]} : vector<2x256xf32> to vector<2x128xf32>
    %89 = arith.negf %88 : vector<2x128xf32>
    %90 = math.exp %89 : vector<2x128xf32>
    %cst_22 = arith.constant 1.000000e+00 : f32
    %91 = vector.broadcast %cst_22 : f32 to vector<2x128xf32>
    %92 = arith.addf %91, %90 : vector<2x128xf32>
    %93 = arith.divf %91, %92 : vector<2x128xf32>
    %94 = vector.extract_strided_slice %87 {offsets = [0, 128], sizes = [2, 128], strides = [1, 1]} : vector<2x256xf32> to vector<2x128xf32>
    %95 = math.tanh %94 : vector<2x128xf32>
    %96 = arith.negf %94 : vector<2x128xf32>
    %97 = math.exp %96 : vector<2x128xf32>
    %cst_23 = arith.constant 1.000000e+00 : f32
    %98 = vector.broadcast %cst_23 : f32 to vector<2x128xf32>
    %99 = arith.addf %98, %97 : vector<2x128xf32>
    %100 = arith.divf %98, %99 : vector<2x128xf32>
    %101 = arith.select %3, %95, %100 : vector<2x128xi1>, vector<2x128xf32>
    %102 = vector.extract_strided_slice %93 {offsets = [0, 0], sizes = [2, 64], strides = [1, 1]} : vector<2x128xf32> to vector<2x64xf32>
    %103 = vector.extract_strided_slice %93 {offsets = [0, 64], sizes = [2, 64], strides = [1, 1]} : vector<2x128xf32> to vector<2x64xf32>
    %104 = vector.extract_strided_slice %101 {offsets = [0, 0], sizes = [2, 64], strides = [1, 1]} : vector<2x128xf32> to vector<2x64xf32>
    %105 = vector.extract_strided_slice %101 {offsets = [0, 64], sizes = [2, 64], strides = [1, 1]} : vector<2x128xf32> to vector<2x64xf32>
    %106 = arith.mulf %103, %69 : vector<2x64xf32>
    %107 = arith.mulf %102, %104 : vector<2x64xf32>
    %108 = arith.addf %106, %107 : vector<2x64xf32>
    %109 = math.tanh %108 : vector<2x64xf32>
    %110 = arith.mulf %105, %109 : vector<2x64xf32>
    %111 = vector.extract_strided_slice %110 {offsets = [0, 0], sizes = [2, 32], strides = [1, 1]} : vector<2x64xf32> to vector<2x32xf32>
    %112 = arith.index_cast %c2_i32 : i32 to index
    %c0_24 = arith.constant 0 : index
    %c0_25 = arith.constant 0 : index
    %113 = vector.load %arg3[%112, %c0_24, %c0_25] : memref<8x2x64xf32, #tpu.memory_space<vmem>>, vector<1x2x32xf32>
    %114 = vector.shape_cast %113 : vector<1x2x32xf32> to vector<2x32xf32>
    %115 = vector.shape_cast %111 : vector<2x32xf32> to vector<1x2x32xf32>
    tpu.vector_store %arg3[%112, %c0_24, %c0_25], %115 {strides = array<i32>} : memref<8x2x64xf32, #tpu.memory_space<vmem>>, vector<1x2x32xf32>,
    %116 = vector.extract_strided_slice %110 {offsets = [0, 32], sizes = [2, 32], strides = [1, 1]} : vector<2x64xf32> to vector<2x32xf32>
    %c7_i32_26 = arith.constant 7 : i32
    %117 = arith.subi %c7_i32_26, %c2_i32 : i32
    %118 = arith.index_cast %117 : i32 to index
    %c0_27 = arith.constant 0 : index
    %c32_28 = arith.constant 32 : index
    %119 = vector.load %arg3[%118, %c0_27, %c32_28] : memref<8x2x64xf32, #tpu.memory_space<vmem>>, vector<1x2x32xf32>
    %120 = vector.shape_cast %119 : vector<1x2x32xf32> to vector<2x32xf32>
    %121 = vector.shape_cast %116 : vector<2x32xf32> to vector<1x2x32xf32>
    tpu.vector_store %arg3[%118, %c0_27, %c32_28], %121 {strides = array<i32>} : memref<8x2x64xf32, #tpu.memory_space<vmem>>, vector<1x2x32xf32>,
    %c3_i32 = arith.constant 3 : i32
    %122 = arith.index_cast %c3_i32 : i32 to index
    %c0_29 = arith.constant 0 : index
    %c0_30 = arith.constant 0 : index
    %123 = vector.load %arg1[%122, %c0_29, %c0_30] : memref<8x2x256xf32, #tpu.memory_space<vmem>>, vector<1x2x256xf32>
    %124 = vector.shape_cast %123 : vector<1x2x256xf32> to vector<2x256xf32>
    %cst_31 = arith.constant dense<0.000000e+00> : vector<2x256xf32>
    %125 = tpu.matmul %110, %0, %cst_31 {dimension_numbers = #tpu.dot_dimension_numbers<[1], [0], [0], [1], [0, 0, 1, 1], [], []>} : vector<2x64xf32>, vector<64x256xf32>, vector<2x256xf32> -> vector<2x256xf32>
    %126 = arith.addf %124, %125 : vector<2x256xf32>
    %127 = vector.extract_strided_slice %126 {offsets = [0, 0], sizes = [2, 128], strides = [1, 1]} : vector<2x256xf32> to vector<2x128xf32>
    %128 = arith.negf %127 : vector<2x128xf32>
    %129 = math.exp %128 : vector<2x128xf32>
    %cst_32 = arith.constant 1.000000e+00 : f32
    %130 = vector.broadcast %cst_32 : f32 to vector<2x128xf32>
    %131 = arith.addf %130, %129 : vector<2x128xf32>
    %132 = arith.divf %130, %131 : vector<2x128xf32>
    %133 = vector.extract_strided_slice %126 {offsets = [0, 128], sizes = [2, 128], strides = [1, 1]} : vector<2x256xf32> to vector<2x128xf32>
    %134 = math.tanh %133 : vector<2x128xf32>
    %135 = arith.negf %133 : vector<2x128xf32>
    %136 = math.exp %135 : vector<2x128xf32>
    %cst_33 = arith.constant 1.000000e+00 : f32
    %137 = vector.broadcast %cst_33 : f32 to vector<2x128xf32>
    %138 = arith.addf %137, %136 : vector<2x128xf32>
    %139 = arith.divf %137, %138 : vector<2x128xf32>
    %140 = arith.select %3, %134, %139 : vector<2x128xi1>, vector<2x128xf32>
    %141 = vector.extract_strided_slice %132 {offsets = [0, 0], sizes = [2, 64], strides = [1, 1]} : vector<2x128xf32> to vector<2x64xf32>
    %142 = vector.extract_strided_slice %132 {offsets = [0, 64], sizes = [2, 64], strides = [1, 1]} : vector<2x128xf32> to vector<2x64xf32>
    %143 = vector.extract_strided_slice %140 {offsets = [0, 0], sizes = [2, 64], strides = [1, 1]} : vector<2x128xf32> to vector<2x64xf32>
    %144 = vector.extract_strided_slice %140 {offsets = [0, 64], sizes = [2, 64], strides = [1, 1]} : vector<2x128xf32> to vector<2x64xf32>
    %145 = arith.mulf %142, %108 : vector<2x64xf32>
    %146 = arith.mulf %141, %143 : vector<2x64xf32>
    %147 = arith.addf %145, %146 : vector<2x64xf32>
    %148 = math.tanh %147 : vector<2x64xf32>
    %149 = arith.mulf %144, %148 : vector<2x64xf32>
    %150 = vector.extract_strided_slice %149 {offsets = [0, 0], sizes = [2, 32], strides = [1, 1]} : vector<2x64xf32> to vector<2x32xf32>
    %151 = arith.index_cast %c3_i32 : i32 to index
    %c0_34 = arith.constant 0 : index
    %c0_35 = arith.constant 0 : index
    %152 = vector.load %arg3[%151, %c0_34, %c0_35] : memref<8x2x64xf32, #tpu.memory_space<vmem>>, vector<1x2x32xf32>
    %153 = vector.shape_cast %152 : vector<1x2x32xf32> to vector<2x32xf32>
    %154 = vector.shape_cast %150 : vector<2x32xf32> to vector<1x2x32xf32>
    tpu.vector_store %arg3[%151, %c0_34, %c0_35], %154 {strides = array<i32>} : memref<8x2x64xf32, #tpu.memory_space<vmem>>, vector<1x2x32xf32>,
    %155 = vector.extract_strided_slice %149 {offsets = [0, 32], sizes = [2, 32], strides = [1, 1]} : vector<2x64xf32> to vector<2x32xf32>
    %c7_i32_36 = arith.constant 7 : i32
    %156 = arith.subi %c7_i32_36, %c3_i32 : i32
    %157 = arith.index_cast %156 : i32 to index
    %c0_37 = arith.constant 0 : index
    %c32_38 = arith.constant 32 : index
    %158 = vector.load %arg3[%157, %c0_37, %c32_38] : memref<8x2x64xf32, #tpu.memory_space<vmem>>, vector<1x2x32xf32>
    %159 = vector.shape_cast %158 : vector<1x2x32xf32> to vector<2x32xf32>
    %160 = vector.shape_cast %155 : vector<2x32xf32> to vector<1x2x32xf32>
    tpu.vector_store %arg3[%157, %c0_37, %c32_38], %160 {strides = array<i32>} : memref<8x2x64xf32, #tpu.memory_space<vmem>>, vector<1x2x32xf32>,
    %c4_i32 = arith.constant 4 : i32
    %161 = arith.index_cast %c4_i32 : i32 to index
    %c0_39 = arith.constant 0 : index
    %c0_40 = arith.constant 0 : index
    %162 = vector.load %arg1[%161, %c0_39, %c0_40] : memref<8x2x256xf32, #tpu.memory_space<vmem>>, vector<1x2x256xf32>
    %163 = vector.shape_cast %162 : vector<1x2x256xf32> to vector<2x256xf32>
    %cst_41 = arith.constant dense<0.000000e+00> : vector<2x256xf32>
    %164 = tpu.matmul %149, %0, %cst_41 {dimension_numbers = #tpu.dot_dimension_numbers<[1], [0], [0], [1], [0, 0, 1, 1], [], []>} : vector<2x64xf32>, vector<64x256xf32>, vector<2x256xf32> -> vector<2x256xf32>
    %165 = arith.addf %163, %164 : vector<2x256xf32>
    %166 = vector.extract_strided_slice %165 {offsets = [0, 0], sizes = [2, 128], strides = [1, 1]} : vector<2x256xf32> to vector<2x128xf32>
    %167 = arith.negf %166 : vector<2x128xf32>
    %168 = math.exp %167 : vector<2x128xf32>
    %cst_42 = arith.constant 1.000000e+00 : f32
    %169 = vector.broadcast %cst_42 : f32 to vector<2x128xf32>
    %170 = arith.addf %169, %168 : vector<2x128xf32>
    %171 = arith.divf %169, %170 : vector<2x128xf32>
    %172 = vector.extract_strided_slice %165 {offsets = [0, 128], sizes = [2, 128], strides = [1, 1]} : vector<2x256xf32> to vector<2x128xf32>
    %173 = math.tanh %172 : vector<2x128xf32>
    %174 = arith.negf %172 : vector<2x128xf32>
    %175 = math.exp %174 : vector<2x128xf32>
    %cst_43 = arith.constant 1.000000e+00 : f32
    %176 = vector.broadcast %cst_43 : f32 to vector<2x128xf32>
    %177 = arith.addf %176, %175 : vector<2x128xf32>
    %178 = arith.divf %176, %177 : vector<2x128xf32>
    %179 = arith.select %3, %173, %178 : vector<2x128xi1>, vector<2x128xf32>
    %180 = vector.extract_strided_slice %171 {offsets = [0, 0], sizes = [2, 64], strides = [1, 1]} : vector<2x128xf32> to vector<2x64xf32>
    %181 = vector.extract_strided_slice %171 {offsets = [0, 64], sizes = [2, 64], strides = [1, 1]} : vector<2x128xf32> to vector<2x64xf32>
    %182 = vector.extract_strided_slice %179 {offsets = [0, 0], sizes = [2, 64], strides = [1, 1]} : vector<2x128xf32> to vector<2x64xf32>
    %183 = vector.extract_strided_slice %179 {offsets = [0, 64], sizes = [2, 64], strides = [1, 1]} : vector<2x128xf32> to vector<2x64xf32>
    %184 = arith.mulf %181, %147 : vector<2x64xf32>
    %185 = arith.mulf %180, %182 : vector<2x64xf32>
    %186 = arith.addf %184, %185 : vector<2x64xf32>
    %187 = math.tanh %186 : vector<2x64xf32>
    %188 = arith.mulf %183, %187 : vector<2x64xf32>
    %189 = vector.extract_strided_slice %188 {offsets = [0, 0], sizes = [2, 32], strides = [1, 1]} : vector<2x64xf32> to vector<2x32xf32>
    %190 = arith.index_cast %c4_i32 : i32 to index
    %c0_44 = arith.constant 0 : index
    %c0_45 = arith.constant 0 : index
    %191 = vector.load %arg3[%190, %c0_44, %c0_45] : memref<8x2x64xf32, #tpu.memory_space<vmem>>, vector<1x2x32xf32>
    %192 = vector.shape_cast %191 : vector<1x2x32xf32> to vector<2x32xf32>
    %193 = vector.shape_cast %189 : vector<2x32xf32> to vector<1x2x32xf32>
    tpu.vector_store %arg3[%190, %c0_44, %c0_45], %193 {strides = array<i32>} : memref<8x2x64xf32, #tpu.memory_space<vmem>>, vector<1x2x32xf32>,
    %194 = vector.extract_strided_slice %188 {offsets = [0, 32], sizes = [2, 32], strides = [1, 1]} : vector<2x64xf32> to vector<2x32xf32>
    %c7_i32_46 = arith.constant 7 : i32
    %195 = arith.subi %c7_i32_46, %c4_i32 : i32
    %196 = arith.index_cast %195 : i32 to index
    %c0_47 = arith.constant 0 : index
    %c32_48 = arith.constant 32 : index
    %197 = vector.load %arg3[%196, %c0_47, %c32_48] : memref<8x2x64xf32, #tpu.memory_space<vmem>>, vector<1x2x32xf32>
    %198 = vector.shape_cast %197 : vector<1x2x32xf32> to vector<2x32xf32>
    %199 = vector.shape_cast %194 : vector<2x32xf32> to vector<1x2x32xf32>
    tpu.vector_store %arg3[%196, %c0_47, %c32_48], %199 {strides = array<i32>} : memref<8x2x64xf32, #tpu.memory_space<vmem>>, vector<1x2x32xf32>,
    %c5_i32 = arith.constant 5 : i32
    %200 = arith.index_cast %c5_i32 : i32 to index
    %c0_49 = arith.constant 0 : index
    %c0_50 = arith.constant 0 : index
    %201 = vector.load %arg1[%200, %c0_49, %c0_50] : memref<8x2x256xf32, #tpu.memory_space<vmem>>, vector<1x2x256xf32>
    %202 = vector.shape_cast %201 : vector<1x2x256xf32> to vector<2x256xf32>
    %cst_51 = arith.constant dense<0.000000e+00> : vector<2x256xf32>
    %203 = tpu.matmul %188, %0, %cst_51 {dimension_numbers = #tpu.dot_dimension_numbers<[1], [0], [0], [1], [0, 0, 1, 1], [], []>} : vector<2x64xf32>, vector<64x256xf32>, vector<2x256xf32> -> vector<2x256xf32>
    %204 = arith.addf %202, %203 : vector<2x256xf32>
    %205 = vector.extract_strided_slice %204 {offsets = [0, 0], sizes = [2, 128], strides = [1, 1]} : vector<2x256xf32> to vector<2x128xf32>
    %206 = arith.negf %205 : vector<2x128xf32>
    %207 = math.exp %206 : vector<2x128xf32>
    %cst_52 = arith.constant 1.000000e+00 : f32
    %208 = vector.broadcast %cst_52 : f32 to vector<2x128xf32>
    %209 = arith.addf %208, %207 : vector<2x128xf32>
    %210 = arith.divf %208, %209 : vector<2x128xf32>
    %211 = vector.extract_strided_slice %204 {offsets = [0, 128], sizes = [2, 128], strides = [1, 1]} : vector<2x256xf32> to vector<2x128xf32>
    %212 = math.tanh %211 : vector<2x128xf32>
    %213 = arith.negf %211 : vector<2x128xf32>
    %214 = math.exp %213 : vector<2x128xf32>
    %cst_53 = arith.constant 1.000000e+00 : f32
    %215 = vector.broadcast %cst_53 : f32 to vector<2x128xf32>
    %216 = arith.addf %215, %214 : vector<2x128xf32>
    %217 = arith.divf %215, %216 : vector<2x128xf32>
    %218 = arith.select %3, %212, %217 : vector<2x128xi1>, vector<2x128xf32>
    %219 = vector.extract_strided_slice %210 {offsets = [0, 0], sizes = [2, 64], strides = [1, 1]} : vector<2x128xf32> to vector<2x64xf32>
    %220 = vector.extract_strided_slice %210 {offsets = [0, 64], sizes = [2, 64], strides = [1, 1]} : vector<2x128xf32> to vector<2x64xf32>
    %221 = vector.extract_strided_slice %218 {offsets = [0, 0], sizes = [2, 64], strides = [1, 1]} : vector<2x128xf32> to vector<2x64xf32>
    %222 = vector.extract_strided_slice %218 {offsets = [0, 64], sizes = [2, 64], strides = [1, 1]} : vector<2x128xf32> to vector<2x64xf32>
    %223 = arith.mulf %220, %186 : vector<2x64xf32>
    %224 = arith.mulf %219, %221 : vector<2x64xf32>
    %225 = arith.addf %223, %224 : vector<2x64xf32>
    %226 = math.tanh %225 : vector<2x64xf32>
    %227 = arith.mulf %222, %226 : vector<2x64xf32>
    %228 = vector.extract_strided_slice %227 {offsets = [0, 0], sizes = [2, 32], strides = [1, 1]} : vector<2x64xf32> to vector<2x32xf32>
    %229 = arith.index_cast %c5_i32 : i32 to index
    %c0_54 = arith.constant 0 : index
    %c0_55 = arith.constant 0 : index
    %230 = vector.load %arg3[%229, %c0_54, %c0_55] : memref<8x2x64xf32, #tpu.memory_space<vmem>>, vector<1x2x32xf32>
    %231 = vector.shape_cast %230 : vector<1x2x32xf32> to vector<2x32xf32>
    %232 = vector.shape_cast %228 : vector<2x32xf32> to vector<1x2x32xf32>
    tpu.vector_store %arg3[%229, %c0_54, %c0_55], %232 {strides = array<i32>} : memref<8x2x64xf32, #tpu.memory_space<vmem>>, vector<1x2x32xf32>,
    %233 = vector.extract_strided_slice %227 {offsets = [0, 32], sizes = [2, 32], strides = [1, 1]} : vector<2x64xf32> to vector<2x32xf32>
    %c7_i32_56 = arith.constant 7 : i32
    %234 = arith.subi %c7_i32_56, %c5_i32 : i32
    %235 = arith.index_cast %234 : i32 to index
    %c0_57 = arith.constant 0 : index
    %c32_58 = arith.constant 32 : index
    %236 = vector.load %arg3[%235, %c0_57, %c32_58] : memref<8x2x64xf32, #tpu.memory_space<vmem>>, vector<1x2x32xf32>
    %237 = vector.shape_cast %236 : vector<1x2x32xf32> to vector<2x32xf32>
    %238 = vector.shape_cast %233 : vector<2x32xf32> to vector<1x2x32xf32>
    tpu.vector_store %arg3[%235, %c0_57, %c32_58], %238 {strides = array<i32>} : memref<8x2x64xf32, #tpu.memory_space<vmem>>, vector<1x2x32xf32>,
    %c6_i32 = arith.constant 6 : i32
    %239 = arith.index_cast %c6_i32 : i32 to index
    %c0_59 = arith.constant 0 : index
    %c0_60 = arith.constant 0 : index
    %240 = vector.load %arg1[%239, %c0_59, %c0_60] : memref<8x2x256xf32, #tpu.memory_space<vmem>>, vector<1x2x256xf32>
    %241 = vector.shape_cast %240 : vector<1x2x256xf32> to vector<2x256xf32>
    %cst_61 = arith.constant dense<0.000000e+00> : vector<2x256xf32>
    %242 = tpu.matmul %227, %0, %cst_61 {dimension_numbers = #tpu.dot_dimension_numbers<[1], [0], [0], [1], [0, 0, 1, 1], [], []>} : vector<2x64xf32>, vector<64x256xf32>, vector<2x256xf32> -> vector<2x256xf32>
    %243 = arith.addf %241, %242 : vector<2x256xf32>
    %244 = vector.extract_strided_slice %243 {offsets = [0, 0], sizes = [2, 128], strides = [1, 1]} : vector<2x256xf32> to vector<2x128xf32>
    %245 = arith.negf %244 : vector<2x128xf32>
    %246 = math.exp %245 : vector<2x128xf32>
    %cst_62 = arith.constant 1.000000e+00 : f32
    %247 = vector.broadcast %cst_62 : f32 to vector<2x128xf32>
    %248 = arith.addf %247, %246 : vector<2x128xf32>
    %249 = arith.divf %247, %248 : vector<2x128xf32>
    %250 = vector.extract_strided_slice %243 {offsets = [0, 128], sizes = [2, 128], strides = [1, 1]} : vector<2x256xf32> to vector<2x128xf32>
    %251 = math.tanh %250 : vector<2x128xf32>
    %252 = arith.negf %250 : vector<2x128xf32>
    %253 = math.exp %252 : vector<2x128xf32>
    %cst_63 = arith.constant 1.000000e+00 : f32
    %254 = vector.broadcast %cst_63 : f32 to vector<2x128xf32>
    %255 = arith.addf %254, %253 : vector<2x128xf32>
    %256 = arith.divf %254, %255 : vector<2x128xf32>
    %257 = arith.select %3, %251, %256 : vector<2x128xi1>, vector<2x128xf32>
    %258 = vector.extract_strided_slice %249 {offsets = [0, 0], sizes = [2, 64], strides = [1, 1]} : vector<2x128xf32> to vector<2x64xf32>
    %259 = vector.extract_strided_slice %249 {offsets = [0, 64], sizes = [2, 64], strides = [1, 1]} : vector<2x128xf32> to vector<2x64xf32>
    %260 = vector.extract_strided_slice %257 {offsets = [0, 0], sizes = [2, 64], strides = [1, 1]} : vector<2x128xf32> to vector<2x64xf32>
    %261 = vector.extract_strided_slice %257 {offsets = [0, 64], sizes = [2, 64], strides = [1, 1]} : vector<2x128xf32> to vector<2x64xf32>
    %262 = arith.mulf %259, %225 : vector<2x64xf32>
    %263 = arith.mulf %258, %260 : vector<2x64xf32>
    %264 = arith.addf %262, %263 : vector<2x64xf32>
    %265 = math.tanh %264 : vector<2x64xf32>
    %266 = arith.mulf %261, %265 : vector<2x64xf32>
    %267 = vector.extract_strided_slice %266 {offsets = [0, 0], sizes = [2, 32], strides = [1, 1]} : vector<2x64xf32> to vector<2x32xf32>
    %268 = arith.index_cast %c6_i32 : i32 to index
    %c0_64 = arith.constant 0 : index
    %c0_65 = arith.constant 0 : index
    %269 = vector.load %arg3[%268, %c0_64, %c0_65] : memref<8x2x64xf32, #tpu.memory_space<vmem>>, vector<1x2x32xf32>
    %270 = vector.shape_cast %269 : vector<1x2x32xf32> to vector<2x32xf32>
    %271 = vector.shape_cast %267 : vector<2x32xf32> to vector<1x2x32xf32>
    tpu.vector_store %arg3[%268, %c0_64, %c0_65], %271 {strides = array<i32>} : memref<8x2x64xf32, #tpu.memory_space<vmem>>, vector<1x2x32xf32>,
    %272 = vector.extract_strided_slice %266 {offsets = [0, 32], sizes = [2, 32], strides = [1, 1]} : vector<2x64xf32> to vector<2x32xf32>
    %c7_i32_66 = arith.constant 7 : i32
    %273 = arith.subi %c7_i32_66, %c6_i32 : i32
    %274 = arith.index_cast %273 : i32 to index
    %c0_67 = arith.constant 0 : index
    %c32_68 = arith.constant 32 : index
    %275 = vector.load %arg3[%274, %c0_67, %c32_68] : memref<8x2x64xf32, #tpu.memory_space<vmem>>, vector<1x2x32xf32>
    %276 = vector.shape_cast %275 : vector<1x2x32xf32> to vector<2x32xf32>
    %277 = vector.shape_cast %272 : vector<2x32xf32> to vector<1x2x32xf32>
    tpu.vector_store %arg3[%274, %c0_67, %c32_68], %277 {strides = array<i32>} : memref<8x2x64xf32, #tpu.memory_space<vmem>>, vector<1x2x32xf32>,
    %c7_i32_69 = arith.constant 7 : i32
    %278 = arith.index_cast %c7_i32_69 : i32 to index
    %c0_70 = arith.constant 0 : index
    %c0_71 = arith.constant 0 : index
    %279 = vector.load %arg1[%278, %c0_70, %c0_71] : memref<8x2x256xf32, #tpu.memory_space<vmem>>, vector<1x2x256xf32>
    %280 = vector.shape_cast %279 : vector<1x2x256xf32> to vector<2x256xf32>
    %cst_72 = arith.constant dense<0.000000e+00> : vector<2x256xf32>
    %281 = tpu.matmul %266, %0, %cst_72 {dimension_numbers = #tpu.dot_dimension_numbers<[1], [0], [0], [1], [0, 0, 1, 1], [], []>} : vector<2x64xf32>, vector<64x256xf32>, vector<2x256xf32> -> vector<2x256xf32>
    %282 = arith.addf %280, %281 : vector<2x256xf32>
    %283 = vector.extract_strided_slice %282 {offsets = [0, 0], sizes = [2, 128], strides = [1, 1]} : vector<2x256xf32> to vector<2x128xf32>
    %284 = arith.negf %283 : vector<2x128xf32>
    %285 = math.exp %284 : vector<2x128xf32>
    %cst_73 = arith.constant 1.000000e+00 : f32
    %286 = vector.broadcast %cst_73 : f32 to vector<2x128xf32>
    %287 = arith.addf %286, %285 : vector<2x128xf32>
    %288 = arith.divf %286, %287 : vector<2x128xf32>
    %289 = vector.extract_strided_slice %282 {offsets = [0, 128], sizes = [2, 128], strides = [1, 1]} : vector<2x256xf32> to vector<2x128xf32>
    %290 = math.tanh %289 : vector<2x128xf32>
    %291 = arith.negf %289 : vector<2x128xf32>
    %292 = math.exp %291 : vector<2x128xf32>
    %cst_74 = arith.constant 1.000000e+00 : f32
    %293 = vector.broadcast %cst_74 : f32 to vector<2x128xf32>
    %294 = arith.addf %293, %292 : vector<2x128xf32>
    %295 = arith.divf %293, %294 : vector<2x128xf32>
    %296 = arith.select %3, %290, %295 : vector<2x128xi1>, vector<2x128xf32>
    %297 = vector.extract_strided_slice %288 {offsets = [0, 0], sizes = [2, 64], strides = [1, 1]} : vector<2x128xf32> to vector<2x64xf32>
    %298 = vector.extract_strided_slice %288 {offsets = [0, 64], sizes = [2, 64], strides = [1, 1]} : vector<2x128xf32> to vector<2x64xf32>
    %299 = vector.extract_strided_slice %296 {offsets = [0, 0], sizes = [2, 64], strides = [1, 1]} : vector<2x128xf32> to vector<2x64xf32>
    %300 = vector.extract_strided_slice %296 {offsets = [0, 64], sizes = [2, 64], strides = [1, 1]} : vector<2x128xf32> to vector<2x64xf32>
    %301 = arith.mulf %298, %264 : vector<2x64xf32>
    %302 = arith.mulf %297, %299 : vector<2x64xf32>
    %303 = arith.addf %301, %302 : vector<2x64xf32>
    %304 = math.tanh %303 : vector<2x64xf32>
    %305 = arith.mulf %300, %304 : vector<2x64xf32>
    %306 = vector.extract_strided_slice %305 {offsets = [0, 0], sizes = [2, 32], strides = [1, 1]} : vector<2x64xf32> to vector<2x32xf32>
    %307 = arith.index_cast %c7_i32_69 : i32 to index
    %c0_75 = arith.constant 0 : index
    %c0_76 = arith.constant 0 : index
    %308 = vector.load %arg3[%307, %c0_75, %c0_76] : memref<8x2x64xf32, #tpu.memory_space<vmem>>, vector<1x2x32xf32>
    %309 = vector.shape_cast %308 : vector<1x2x32xf32> to vector<2x32xf32>
    %310 = vector.shape_cast %306 : vector<2x32xf32> to vector<1x2x32xf32>
    tpu.vector_store %arg3[%307, %c0_75, %c0_76], %310 {strides = array<i32>} : memref<8x2x64xf32, #tpu.memory_space<vmem>>, vector<1x2x32xf32>,
    %311 = vector.extract_strided_slice %305 {offsets = [0, 32], sizes = [2, 32], strides = [1, 1]} : vector<2x64xf32> to vector<2x32xf32>
    %c7_i32_77 = arith.constant 7 : i32
    %312 = arith.subi %c7_i32_77, %c7_i32_69 : i32
    %313 = arith.index_cast %312 : i32 to index
    %c0_78 = arith.constant 0 : index
    %c32_79 = arith.constant 32 : index
    %314 = vector.load %arg3[%313, %c0_78, %c32_79] : memref<8x2x64xf32, #tpu.memory_space<vmem>>, vector<1x2x32xf32>
    %315 = vector.shape_cast %314 : vector<1x2x32xf32> to vector<2x32xf32>
    %316 = vector.shape_cast %311 : vector<2x32xf32> to vector<1x2x32xf32>
    tpu.vector_store %arg3[%313, %c0_78, %c32_79], %316 {strides = array<i32>} : memref<8x2x64xf32, #tpu.memory_space<vmem>>, vector<1x2x32xf32>,
    %c8_i32 = arith.constant 8 : i32
    return
  }
  func.func @transform_0(%arg0: i32) -> (i32, i32, i32) {
    %c0_i32 = arith.constant 0 : i32
    %c0_i32_0 = arith.constant 0 : i32
    %c0_i32_1 = arith.constant 0 : i32
    %c0_i32_2 = arith.constant 0 : i32
    return %c0_i32, %c0_i32_0, %c0_i32_1 : i32, i32, i32
  }
  func.func @transform_1(%arg0: i32) -> (i32, i32) {
    %c0_i32 = arith.constant 0 : i32
    %c0_i32_0 = arith.constant 0 : i32
    %c0_i32_1 = arith.constant 0 : i32
    return %c0_i32, %c0_i32_0 : i32, i32
  }
  func.func @transform_2(%arg0: i32) -> (i32, i32, i32) {
    %c0_i32 = arith.constant 0 : i32
    %c0_i32_0 = arith.constant 0 : i32
    %c0_i32_1 = arith.constant 0 : i32
    %c0_i32_2 = arith.constant 0 : i32
    return %c0_i32, %c0_i32_0, %c0_i32_1 : i32, i32, i32
  }
}

</mosaic_0001>

<llo_original>
// kernel: each_repr_lstm_forward.1
$region0: #{each_repr_lstm_forward.1}
  #allocation0 [shape = 'u32[]', space=smem, size = 0x4, offset = 0x4, fixed_abs, tag = 'smem constant byte address 0x4 - core index']
  #allocation1 [shape = 'u32[144,128]{1,0:T(1,128)}', space=vmem, size = 0x12000, scoped, tag = 'internal scratch']
  %s0 = inlined_call_operand.vmem [shape: f32[8,2,256], index: 0, kind: input, shape index: {}]
  %s1 = inlined_call_operand.vmem [shape: f32[64,256], index: 1, kind: input, shape index: {}]
  %s2 = inlined_call_operand.vmem [shape: f32[8,2,64], index: 2, kind: output, shape index: {}]
  %s3 = sld [smem:[#allocation0]]
  $region18: #{each_repr_lstm_forward.1} parent=0
    _
  %s5 = ssub.s32 1, %s3
  %s6 = scalar_select 0, %s5, %s3
  // Predicated region
  $region2: #{each_repr_lstm_forward.1} parent=0 // pred_check
    _
  $region3: #{each_repr_lstm_forward.1} parent=0 // pred_check_branch
    %8 = sbr.rel (0) target = $region5
  $region4: #{each_repr_lstm_forward.1} parent=0 // pred_region
    _
  $region5: #{each_repr_lstm_forward.1} parent=0 // pred_fallthru
    _
  // Predicated region
  $region6: #{each_repr_lstm_forward.1} parent=0 // pred_check
    _
  $region7: #{each_repr_lstm_forward.1} parent=0 // pred_check_branch
    %10 = sbr.rel (0) target = $region9
  $region8: #{each_repr_lstm_forward.1} parent=0 // pred_region
    _
  $region9: #{each_repr_lstm_forward.1} parent=0 // pred_fallthru
    _
  %v11 = vld [vmem:[%s1] sm:$0xff]
  %v12 = vld [vmem:[%s1 + $0x8] sm:$0xff]
  %v13 = vld [vmem:[%s1 + $0x10] sm:$0xff]
  %v14 = vld [vmem:[%s1 + $0x18] sm:$0xff]
  %v15 = vld [vmem:[%s1 + $0x20] sm:$0xff]
  %v16 = vld [vmem:[%s1 + $0x28] sm:$0xff]
  %v17 = vld [vmem:[%s1 + $0x30] sm:$0xff]
  %v18 = vld [vmem:[%s1 + $0x38] sm:$0xff]
  %v19 = vld [vmem:[%s1 + $0x40] sm:$0xff]
  %v20 = vld [vmem:[%s1 + $0x48] sm:$0xff]
  %v21 = vld [vmem:[%s1 + $0x50] sm:$0xff]
  %v22 = vld [vmem:[%s1 + $0x58] sm:$0xff]
  %v23 = vld [vmem:[%s1 + $0x60] sm:$0xff]
  %v24 = vld [vmem:[%s1 + $0x68] sm:$0xff]
  %v25 = vld [vmem:[%s1 + $0x70] sm:$0xff]
  %v26 = vld [vmem:[%s1 + $0x78] sm:$0xff]
  %v27 = vlaneseq
  %v28 = vand.u32 %v27, 127
  %vm29 = vcmp.lt.s32.totalorder %v28, 64
  %v30 = vld [vmem:[%s0] sm:$0xf]
  %vm31 = vcmask 523264
  %v33 = vsel %vm31, 0.0, 0
  %35 = vmatprep.subr.mxu0 %v12
  %36 = vmatpush1.msra.mxu0 %v11
  %37 = vmatprep.subr.mxu0 %v14
  %38 = vmatpush1.msra.mxu0 %v13
  %39 = vmatprep.subr.mxu0 %v16
  %40 = vmatpush1.msra.mxu0 %v15
  %41 = vmatprep.subr.mxu0 %v18
  %42 = vmatpush1.msra.mxu0 %v17
  %43 = vmatprep.subr.mxu0 %v20
  %44 = vmatpush1.msra.mxu0 %v19
  %45 = vmatprep.subr.mxu0 %v22
  %46 = vmatpush1.msra.mxu0 %v21
  %47 = vmatprep.subr.mxu0 %v24
  %48 = vmatpush1.msra.mxu0 %v23
  %49 = vmatprep.subr.mxu0 %v26
  %50 = vmatpush1.msra.mxu0 %v25
  %51 = vmatprep.subr.mxu0 0.0
  %52 = vmatpush1.msra.mxu0 0.0
  %53 = vmatprep.subr.mxu0 0.0
  %54 = vmatpush1.msra.mxu0 0.0
  %55 = vmatprep.subr.mxu0 0.0
  %56 = vmatpush1.msra.mxu0 0.0
  %57 = vmatprep.subr.mxu0 0.0
  %58 = vmatpush1.msra.mxu0 0.0
  %59 = vmatprep.subr.mxu0 0.0
  %60 = vmatpush1.msra.mxu0 0.0
  %61 = vmatprep.subr.mxu0 0.0
  %62 = vmatpush1.msra.mxu0 0.0
  %63 = vmatprep.subr.mxu0 0.0
  %64 = vmatpush1.msra.mxu0 0.0
  %65 = vmatprep.subr.mxu0 0.0
  %66 = vmatpush1.msra.mxu0 0.0
  %67 = vmatprep.subr.mxu0 0.0
  %68 = vmatpush1.msra.mxu0 0.0
  %69 = vmatprep.subr.mxu0 0.0
  %70 = vmatpush1.msra.mxu0 0.0
  %71 = vmatprep.subr.mxu0 0.0
  %72 = vmatpush1.msra.mxu0 0.0
  %73 = vmatprep.subr.mxu0 0.0
  %74 = vmatpush1.msra.mxu0 0.0
  %75 = vmatprep.subr.mxu0 0.0
  %76 = vmatpush1.msra.mxu0 0.0
  %77 = vmatprep.subr.mxu0 0.0
  %78 = vmatpush1.msra.mxu0 0.0
  %79 = vmatprep.subr.mxu0 0.0
  %80 = vmatpush1.msra.mxu0 0.0
  %81 = vmatprep.subr.mxu0 0.0
  %82 = vmatpush1.msra.mxu0 0.0
  %83 = vmatprep.subr.mxu0 0.0
  %84 = vmatpush1.msra.mxu0 0.0
  %85 = vmatprep.subr.mxu0 0.0
  %86 = vmatpush1.msra.mxu0 0.0
  %87 = vmatprep.subr.mxu0 0.0
  %88 = vmatpush1.msra.mxu0 0.0
  %89 = vmatprep.subr.mxu0 0.0
  %90 = vmatpush1.msra.mxu0 0.0
  %91 = vmatprep.subr.mxu0 0.0
  %92 = vmatpush1.msra.mxu0 0.0
  %93 = vmatprep.subr.mxu0 0.0
  %94 = vmatpush1.msra.mxu0 0.0
  %95 = vmatprep.subr.mxu0 0.0
  %96 = vmatpush1.msra.mxu0 0.0
  %97 = vmatprep.subr.mxu0 0.0
  %98 = vmatpush1.msra.mxu0 0.0
  %99 = vmatprep.mubr.f32.mxu0 0.0
  %100 = vmatmul.mubr.f32.gmra.mrb[0].mxu0 %v33
  %v101 = vpop.f32.mrb[0].mxu0
  %v102 = vadd.f32 0.0, %v101
  %v103 = vpop.f32.mrb[0].mxu0
  %v104 = vadd.f32 0.0, %v103
  %105 = vdwg.mxu0
  %v108 = vcombine.low %v102, %v104
  %v110 = vunpack.c.l.s4 1983009808
  %v111 = vunpack.c.0.s8 %v110
  %v112 = vlaneseq
  %v113 = vshrl.u32 %v112, 7
  %v114 = vsub.s32 %v111, %v113
  %v115 = vrot.slane %v108, %v114
  %v117 = vadd.f32 %v30, %v115
  %v118 = vxor.u32 %v117, 2147483648
  %v119 = vmul.f32 %v118, 1.442695
  %v120 = vpow.pop %v119
  %v121 = vadd.f32 %v120, 1.0
  %v122 = vrcp.pop %v121
  %v123 = vmul.f32 1.0, %v122
  %v125 = vrot.slane %v117, 2
  %v127 = vtanh.pop %v125
  %v128 = vxor.u32 %v125, 2147483648
  %v129 = vmul.f32 %v128, 1.442695
  %v130 = vpow.pop %v129
  %v131 = vadd.f32 %v130, 1.0
  %v132 = vrcp.pop %v131
  %v133 = vmul.f32 1.0, %v132
  %v134 = vsel %vm29, %v127, %v133
  %v135 = vmul.f32 %v123, 0.0
  %v136 = vmul.f32 %v123, %v134
  %138 = vrot.lane.b32.xlu0 %v136, 64
  %v139 = vpop.permute.xlu0 %138
  %v141 = vadd.f32 %v135, %v139
  %v142 = vtanh.pop %v141
  %v143 = vmul.f32 %v134, %v142
  %145 = vrot.lane.b32.xlu0 %v143, 64
  %v146 = vpop.permute.xlu0 %145
  %vm148 = vcmask 254976
  %149 = vst.msk [vmem:[%s2] sm:$0x3] %vm148, %v146
  %s150 = scalar_lea.vmem %s2, 14
  %vm151 = vcmask 517376
  %152 = vst.msk [vmem:[%s150] sm:$0x3] %vm151, %v146
  %s153 = scalar_lea.vmem %s0, 4
  %v154 = vld [vmem:[%s153] sm:$0xf]
  %v155 = vsel %vm31, %v146, 0
  %157 = vmatprep.subr.mxu0 %v12
  %158 = vmatpush1.msra.mxu0 %v11
  %159 = vmatprep.subr.mxu0 %v14
  %160 = vmatpush1.msra.mxu0 %v13
  %161 = vmatprep.subr.mxu0 %v16
  %162 = vmatpush1.msra.mxu0 %v15
  %163 = vmatprep.subr.mxu0 %v18
  %164 = vmatpush1.msra.mxu0 %v17
  %165 = vmatprep.subr.mxu0 %v20
  %166 = vmatpush1.msra.mxu0 %v19
  %167 = vmatprep.subr.mxu0 %v22
  %168 = vmatpush1.msra.mxu0 %v21
  %169 = vmatprep.subr.mxu0 %v24
  %170 = vmatpush1.msra.mxu0 %v23
  %171 = vmatprep.subr.mxu0 %v26
  %172 = vmatpush1.msra.mxu0 %v25
  %173 = vmatprep.subr.mxu0 0.0
  %174 = vmatpush1.msra.mxu0 0.0
  %175 = vmatprep.subr.mxu0 0.0
  %176 = vmatpush1.msra.mxu0 0.0
  %177 = vmatprep.subr.mxu0 0.0
  %178 = vmatpush1.msra.mxu0 0.0
  %179 = vmatprep.subr.mxu0 0.0
  %180 = vmatpush1.msra.mxu0 0.0
  %181 = vmatprep.subr.mxu0 0.0
  %182 = vmatpush1.msra.mxu0 0.0
  %183 = vmatprep.subr.mxu0 0.0
  %184 = vmatpush1.msra.mxu0 0.0
  %185 = vmatprep.subr.mxu0 0.0
  %186 = vmatpush1.msra.mxu0 0.0
  %187 = vmatprep.subr.mxu0 0.0
  %188 = vmatpush1.msra.mxu0 0.0
  %189 = vmatprep.subr.mxu0 0.0
  %190 = vmatpush1.msra.mxu0 0.0
  %191 = vmatprep.subr.mxu0 0.0
  %192 = vmatpush1.msra.mxu0 0.0
  %193 = vmatprep.subr.mxu0 0.0
  %194 = vmatpush1.msra.mxu0 0.0
  %195 = vmatprep.subr.mxu0 0.0
  %196 = vmatpush1.msra.mxu0 0.0
  %197 = vmatprep.subr.mxu0 0.0
  %198 = vmatpush1.msra.mxu0 0.0
  %199 = vmatprep.subr.mxu0 0.0
  %200 = vmatpush1.msra.mxu0 0.0
  %201 = vmatprep.subr.mxu0 0.0
  %202 = vmatpush1.msra.mxu0 0.0
  %203 = vmatprep.subr.mxu0 0.0
  %204 = vmatpush1.msra.mxu0 0.0
  %205 = vmatprep.subr.mxu0 0.0
  %206 = vmatpush1.msra.mxu0 0.0
  %207 = vmatprep.subr.mxu0 0.0
  %208 = vmatpush1.msra.mxu0 0.0
  %209 = vmatprep.subr.mxu0 0.0
  %210 = vmatpush1.msra.mxu0 0.0
  %211 = vmatprep.subr.mxu0 0.0
  %212 = vmatpush1.msra.mxu0 0.0
  %213 = vmatprep.subr.mxu0 0.0
  %214 = vmatpush1.msra.mxu0 0.0
  %215 = vmatprep.subr.mxu0 0.0
  %216 = vmatpush1.msra.mxu0 0.0
  %217 = vmatprep.subr.mxu0 0.0
  %218 = vmatpush1.msra.mxu0 0.0
  %219 = vmatprep.subr.mxu0 0.0
  %220 = vmatpush1.msra.mxu0 0.0
  %221 = vmatprep.mubr.f32.mxu0 0.0
  %222 = vmatmul.mubr.f32.gmra.mrb[0].mxu0 %v155
  %v223 = vpop.f32.mrb[0].mxu0
  %v224 = vadd.f32 0.0, %v223
  %v225 = vpop.f32.mrb[0].mxu0
  %v226 = vadd.f32 0.0, %v225
  %227 = vdwg.mxu0
  %v230 = vcombine.low %v224, %v226
  %v232 = vunpack.c.l.s4 1983009808
  %v233 = vunpack.c.0.s8 %v232
  %v234 = vlaneseq
  %v235 = vshrl.u32 %v234, 7
  %v236 = vsub.s32 %v233, %v235
  %v237 = vrot.slane %v230, %v236
  %v239 = vadd.f32 %v154, %v237
  %v240 = vxor.u32 %v239, 2147483648
  %v241 = vmul.f32 %v240, 1.442695
  %v242 = vpow.pop %v241
  %v243 = vadd.f32 %v242, 1.0
  %v244 = vrcp.pop %v243
  %v245 = vmul.f32 1.0, %v244
  %v247 = vrot.slane %v239, 2
  %v249 = vtanh.pop %v247
  %v250 = vxor.u32 %v247, 2147483648
  %v251 = vmul.f32 %v250, 1.442695
  %v252 = vpow.pop %v251
  %v253 = vadd.f32 %v252, 1.0
  %v254 = vrcp.pop %v253
  %v255 = vmul.f32 1.0, %v254
  %v256 = vsel %vm29, %v249, %v255
  %v257 = vmul.f32 %v245, %v141
  %v258 = vmul.f32 %v245, %v256
  %260 = vrot.lane.b32.xlu0 %v258, 64
  %v261 = vpop.permute.xlu0 %260
  %v263 = vadd.f32 %v257, %v261
  %v264 = vtanh.pop %v263
  %v265 = vmul.f32 %v256, %v264
  %267 = vrot.lane.b32.xlu0 %v265, 64
  %v268 = vpop.permute.xlu0 %267
  %s270 = scalar_lea.vmem %s2, 2
  %271 = vst.msk [vmem:[%s270] sm:$0x3] %vm148, %v268
  %s272 = scalar_lea.vmem %s2, 12
  %273 = vst.msk [vmem:[%s272] sm:$0x3] %vm151, %v268
  %s274 = scalar_lea.vmem %s0, 8
  %v275 = vld [vmem:[%s274] sm:$0xf]
  %v276 = vsel %vm31, %v268, 0
  %278 = vmatprep.subr.mxu0 %v12
  %279 = vmatpush1.msra.mxu0 %v11
  %280 = vmatprep.subr.mxu0 %v14
  %281 = vmatpush1.msra.mxu0 %v13
  %282 = vmatprep.subr.mxu0 %v16
  %283 = vmatpush1.msra.mxu0 %v15
  %284 = vmatprep.subr.mxu0 %v18
  %285 = vmatpush1.msra.mxu0 %v17
  %286 = vmatprep.subr.mxu0 %v20
  %287 = vmatpush1.msra.mxu0 %v19
  %288 = vmatprep.subr.mxu0 %v22
  %289 = vmatpush1.msra.mxu0 %v21
  %290 = vmatprep.subr.mxu0 %v24
  %291 = vmatpush1.msra.mxu0 %v23
  %292 = vmatprep.subr.mxu0 %v26
  %293 = vmatpush1.msra.mxu0 %v25
  %294 = vmatprep.subr.mxu0 0.0
  %295 = vmatpush1.msra.mxu0 0.0
  %296 = vmatprep.subr.mxu0 0.0
  %297 = vmatpush1.msra.mxu0 0.0
  %298 = vmatprep.subr.mxu0 0.0
  %299 = vmatpush1.msra.mxu0 0.0
  %300 = vmatprep.subr.mxu0 0.0
  %301 = vmatpush1.msra.mxu0 0.0
  %302 = vmatprep.subr.mxu0 0.0
  %303 = vmatpush1.msra.mxu0 0.0
  %304 = vmatprep.subr.mxu0 0.0
  %305 = vmatpush1.msra.mxu0 0.0
  %306 = vmatprep.subr.mxu0 0.0
  %307 = vmatpush1.msra.mxu0 0.0
  %308 = vmatprep.subr.mxu0 0.0
  %309 = vmatpush1.msra.mxu0 0.0
  %310 = vmatprep.subr.mxu0 0.0
  %311 = vmatpush1.msra.mxu0 0.0
  %312 = vmatprep.subr.mxu0 0.0
  %313 = vmatpush1.msra.mxu0 0.0
  %314 = vmatprep.subr.mxu0 0.0
  %315 = vmatpush1.msra.mxu0 0.0
  %316 = vmatprep.subr.mxu0 0.0
  %317 = vmatpush1.msra.mxu0 0.0
  %318 = vmatprep.subr.mxu0 0.0
  %319 = vmatpush1.msra.mxu0 0.0
  %320 = vmatprep.subr.mxu0 0.0
  %321 = vmatpush1.msra.mxu0 0.0
  %322 = vmatprep.subr.mxu0 0.0
  %323 = vmatpush1.msra.mxu0 0.0
  %324 = vmatprep.subr.mxu0 0.0
  %325 = vmatpush1.msra.mxu0 0.0
  %326 = vmatprep.subr.mxu0 0.0
  %327 = vmatpush1.msra.mxu0 0.0
  %328 = vmatprep.subr.mxu0 0.0
  %329 = vmatpush1.msra.mxu0 0.0
  %330 = vmatprep.subr.mxu0 0.0
  %331 = vmatpush1.msra.mxu0 0.0
  %332 = vmatprep.subr.mxu0 0.0
  %333 = vmatpush1.msra.mxu0 0.0
  %334 = vmatprep.subr.mxu0 0.0
  %335 = vmatpush1.msra.mxu0 0.0
  %336 = vmatprep.subr.mxu0 0.0
  %337 = vmatpush1.msra.mxu0 0.0
  %338 = vmatprep.subr.mxu0 0.0
  %339 = vmatpush1.msra.mxu0 0.0
  %340 = vmatprep.subr.mxu0 0.0
  %341 = vmatpush1.msra.mxu0 0.0
  %342 = vmatprep.mubr.f32.mxu0 0.0
  %343 = vmatmul.mubr.f32.gmra.mrb[0].mxu0 %v276
  %v344 = vpop.f32.mrb[0].mxu0
  %v345 = vadd.f32 0.0, %v344
  %v346 = vpop.f32.mrb[0].mxu0
  %v347 = vadd.f32 0.0, %v346
  %348 = vdwg.mxu0
  %v351 = vcombine.low %v345, %v347
  %v353 = vunpack.c.l.s4 1983009808
  %v354 = vunpack.c.0.s8 %v353
  %v355 = vlaneseq
  %v356 = vshrl.u32 %v355, 7
  %v357 = vsub.s32 %v354, %v356
  %v358 = vrot.slane %v351, %v357
  %v360 = vadd.f32 %v275, %v358
  %v361 = vxor.u32 %v360, 2147483648
  %v362 = vmul.f32 %v361, 1.442695
  %v363 = vpow.pop %v362
  %v364 = vadd.f32 %v363, 1.0
  %v365 = vrcp.pop %v364
  %v366 = vmul.f32 1.0, %v365
  %v368 = vrot.slane %v360, 2
  %v370 = vtanh.pop %v368
  %v371 = vxor.u32 %v368, 2147483648
  %v372 = vmul.f32 %v371, 1.442695
  %v373 = vpow.pop %v372
  %v374 = vadd.f32 %v373, 1.0
  %v375 = vrcp.pop %v374
  %v376 = vmul.f32 1.0, %v375
  %v377 = vsel %vm29, %v370, %v376
  %v378 = vmul.f32 %v366, %v263
  %v379 = vmul.f32 %v366, %v377
  %381 = vrot.lane.b32.xlu0 %v379, 64
  %v382 = vpop.permute.xlu0 %381
  %v384 = vadd.f32 %v378, %v382
  %v385 = vtanh.pop %v384
  %v386 = vmul.f32 %v377, %v385
  %388 = vrot.lane.b32.xlu0 %v386, 64
  %v389 = vpop.permute.xlu0 %388
  %s391 = scalar_lea.vmem %s2, 4
  %392 = vst.msk [vmem:[%s391] sm:$0x3] %vm148, %v389
  %s393 = scalar_lea.vmem %s2, 10
  %394 = vst.msk [vmem:[%s393] sm:$0x3] %vm151, %v389
  %s395 = scalar_lea.vmem %s0, 12
  %v396 = vld [vmem:[%s395] sm:$0xf]
  %v397 = vsel %vm31, %v389, 0
  %399 = vmatprep.subr.mxu0 %v12
  %400 = vmatpush1.msra.mxu0 %v11
  %401 = vmatprep.subr.mxu0 %v14
  %402 = vmatpush1.msra.mxu0 %v13
  %403 = vmatprep.subr.mxu0 %v16
  %404 = vmatpush1.msra.mxu0 %v15
  %405 = vmatprep.subr.mxu0 %v18
  %406 = vmatpush1.msra.mxu0 %v17
  %407 = vmatprep.subr.mxu0 %v20
  %408 = vmatpush1.msra.mxu0 %v19
  %409 = vmatprep.subr.mxu0 %v22
  %410 = vmatpush1.msra.mxu0 %v21
  %411 = vmatprep.subr.mxu0 %v24
  %412 = vmatpush1.msra.mxu0 %v23
  %413 = vmatprep.subr.mxu0 %v26
  %414 = vmatpush1.msra.mxu0 %v25
  %415 = vmatprep.subr.mxu0 0.0
  %416 = vmatpush1.msra.mxu0 0.0
  %417 = vmatprep.subr.mxu0 0.0
  %418 = vmatpush1.msra.mxu0 0.0
  %419 = vmatprep.subr.mxu0 0.0
  %420 = vmatpush1.msra.mxu0 0.0
  %421 = vmatprep.subr.mxu0 0.0
  %422 = vmatpush1.msra.mxu0 0.0
  %423 = vmatprep.subr.mxu0 0.0
  %424 = vmatpush1.msra.mxu0 0.0
  %425 = vmatprep.subr.mxu0 0.0
  %426 = vmatpush1.msra.mxu0 0.0
  %427 = vmatprep.subr.mxu0 0.0
  %428 = vmatpush1.msra.mxu0 0.0
  %429 = vmatprep.subr.mxu0 0.0
  %430 = vmatpush1.msra.mxu0 0.0
  %431 = vmatprep.subr.mxu0 0.0
  %432 = vmatpush1.msra.mxu0 0.0
  %433 = vmatprep.subr.mxu0 0.0
  %434 = vmatpush1.msra.mxu0 0.0
  %435 = vmatprep.subr.mxu0 0.0
  %436 = vmatpush1.msra.mxu0 0.0
  %437 = vmatprep.subr.mxu0 0.0
  %438 = vmatpush1.msra.mxu0 0.0
  %439 = vmatprep.subr.mxu0 0.0
  %440 = vmatpush1.msra.mxu0 0.0
  %441 = vmatprep.subr.mxu0 0.0
  %442 = vmatpush1.msra.mxu0 0.0
  %443 = vmatprep.subr.mxu0 0.0
  %444 = vmatpush1.msra.mxu0 0.0
  %445 = vmatprep.subr.mxu0 0.0
  %446 = vmatpush1.msra.mxu0 0.0
  %447 = vmatprep.subr.mxu0 0.0
  %448 = vmatpush1.msra.mxu0 0.0
  %449 = vmatprep.subr.mxu0 0.0
  %450 = vmatpush1.msra.mxu0 0.0
  %451 = vmatprep.subr.mxu0 0.0
  %452 = vmatpush1.msra.mxu0 0.0
  %453 = vmatprep.subr.mxu0 0.0
  %454 = vmatpush1.msra.mxu0 0.0
  %455 = vmatprep.subr.mxu0 0.0
  %456 = vmatpush1.msra.mxu0 0.0
  %457 = vmatprep.subr.mxu0 0.0
  %458 = vmatpush1.msra.mxu0 0.0
  %459 = vmatprep.subr.mxu0 0.0
  %460 = vmatpush1.msra.mxu0 0.0
  %461 = vmatprep.subr.mxu0 0.0
  %462 = vmatpush1.msra.mxu0 0.0
  %463 = vmatprep.mubr.f32.mxu0 0.0
  %464 = vmatmul.mubr.f32.gmra.mrb[0].mxu0 %v397
  %v465 = vpop.f32.mrb[0].mxu0
  %v466 = vadd.f32 0.0, %v465
  %v467 = vpop.f32.mrb[0].mxu0
  %v468 = vadd.f32 0.0, %v467
  %469 = vdwg.mxu0
  %v472 = vcombine.low %v466, %v468
  %v474 = vunpack.c.l.s4 1983009808
  %v475 = vunpack.c.0.s8 %v474
  %v476 = vlaneseq
  %v477 = vshrl.u32 %v476, 7
  %v478 = vsub.s32 %v475, %v477
  %v479 = vrot.slane %v472, %v478
  %v481 = vadd.f32 %v396, %v479
  %v482 = vxor.u32 %v481, 2147483648
  %v483 = vmul.f32 %v482, 1.442695
  %v484 = vpow.pop %v483
  %v485 = vadd.f32 %v484, 1.0
  %v486 = vrcp.pop %v485
  %v487 = vmul.f32 1.0, %v486
  %v489 = vrot.slane %v481, 2
  %v491 = vtanh.pop %v489
  %v492 = vxor.u32 %v489, 2147483648
  %v493 = vmul.f32 %v492, 1.442695
  %v494 = vpow.pop %v493
  %v495 = vadd.f32 %v494, 1.0
  %v496 = vrcp.pop %v495
  %v497 = vmul.f32 1.0, %v496
  %v498 = vsel %vm29, %v491, %v497
  %v499 = vmul.f32 %v487, %v384
  %v500 = vmul.f32 %v487, %v498
  %502 = vrot.lane.b32.xlu0 %v500, 64
  %v503 = vpop.permute.xlu0 %502
  %v505 = vadd.f32 %v499, %v503
  %v506 = vtanh.pop %v505
  %v507 = vmul.f32 %v498, %v506
  %509 = vrot.lane.b32.xlu0 %v507, 64
  %v510 = vpop.permute.xlu0 %509
  %s512 = scalar_lea.vmem %s2, 6
  %513 = vst.msk [vmem:[%s512] sm:$0x3] %vm148, %v510
  %s514 = scalar_lea.vmem %s2, 8
  %515 = vst.msk [vmem:[%s514] sm:$0x3] %vm151, %v510
  %s516 = scalar_lea.vmem %s0, 16
  %v517 = vld [vmem:[%s516] sm:$0xf]
  %v518 = vsel %vm31, %v510, 0
  %520 = vmatprep.subr.mxu0 %v12
  %521 = vmatpush1.msra.mxu0 %v11
  %522 = vmatprep.subr.mxu0 %v14
  %523 = vmatpush1.msra.mxu0 %v13
  %524 = vmatprep.subr.mxu0 %v16
  %525 = vmatpush1.msra.mxu0 %v15
  %526 = vmatprep.subr.mxu0 %v18
  %527 = vmatpush1.msra.mxu0 %v17
  %528 = vmatprep.subr.mxu0 %v20
  %529 = vmatpush1.msra.mxu0 %v19
  %530 = vmatprep.subr.mxu0 %v22
  %531 = vmatpush1.msra.mxu0 %v21
  %532 = vmatprep.subr.mxu0 %v24
  %533 = vmatpush1.msra.mxu0 %v23
  %534 = vmatprep.subr.mxu0 %v26
  %535 = vmatpush1.msra.mxu0 %v25
  %536 = vmatprep.subr.mxu0 0.0
  %537 = vmatpush1.msra.mxu0 0.0
  %538 = vmatprep.subr.mxu0 0.0
  %539 = vmatpush1.msra.mxu0 0.0
  %540 = vmatprep.subr.mxu0 0.0
  %541 = vmatpush1.msra.mxu0 0.0
  %542 = vmatprep.subr.mxu0 0.0
  %543 = vmatpush1.msra.mxu0 0.0
  %544 = vmatprep.subr.mxu0 0.0
  %545 = vmatpush1.msra.mxu0 0.0
  %546 = vmatprep.subr.mxu0 0.0
  %547 = vmatpush1.msra.mxu0 0.0
  %548 = vmatprep.subr.mxu0 0.0
  %549 = vmatpush1.msra.mxu0 0.0
  %550 = vmatprep.subr.mxu0 0.0
  %551 = vmatpush1.msra.mxu0 0.0
  %552 = vmatprep.subr.mxu0 0.0
  %553 = vmatpush1.msra.mxu0 0.0
  %554 = vmatprep.subr.mxu0 0.0
  %555 = vmatpush1.msra.mxu0 0.0
  %556 = vmatprep.subr.mxu0 0.0
  %557 = vmatpush1.msra.mxu0 0.0
  %558 = vmatprep.subr.mxu0 0.0
  %559 = vmatpush1.msra.mxu0 0.0
  %560 = vmatprep.subr.mxu0 0.0
  %561 = vmatpush1.msra.mxu0 0.0
  %562 = vmatprep.subr.mxu0 0.0
  %563 = vmatpush1.msra.mxu0 0.0
  %564 = vmatprep.subr.mxu0 0.0
  %565 = vmatpush1.msra.mxu0 0.0
  %566 = vmatprep.subr.mxu0 0.0
  %567 = vmatpush1.msra.mxu0 0.0
  %568 = vmatprep.subr.mxu0 0.0
  %569 = vmatpush1.msra.mxu0 0.0
  %570 = vmatprep.subr.mxu0 0.0
  %571 = vmatpush1.msra.mxu0 0.0
  %572 = vmatprep.subr.mxu0 0.0
  %573 = vmatpush1.msra.mxu0 0.0
  %574 = vmatprep.subr.mxu0 0.0
  %575 = vmatpush1.msra.mxu0 0.0
  %576 = vmatprep.subr.mxu0 0.0
  %577 = vmatpush1.msra.mxu0 0.0
  %578 = vmatprep.subr.mxu0 0.0
  %579 = vmatpush1.msra.mxu0 0.0
  %580 = vmatprep.subr.mxu0 0.0
  %581 = vmatpush1.msra.mxu0 0.0
  %582 = vmatprep.subr.mxu0 0.0
  %583 = vmatpush1.msra.mxu0 0.0
  %584 = vmatprep.mubr.f32.mxu0 0.0
  %585 = vmatmul.mubr.f32.gmra.mrb[0].mxu0 %v518
  %v586 = vpop.f32.mrb[0].mxu0
  %v587 = vadd.f32 0.0, %v586
  %v588 = vpop.f32.mrb[0].mxu0
  %v589 = vadd.f32 0.0, %v588
  %590 = vdwg.mxu0
  %v593 = vcombine.low %v587, %v589
  %v595 = vunpack.c.l.s4 1983009808
  %v596 = vunpack.c.0.s8 %v595
  %v597 = vlaneseq
  %v598 = vshrl.u32 %v597, 7
  %v599 = vsub.s32 %v596, %v598
  %v600 = vrot.slane %v593, %v599
  %v602 = vadd.f32 %v517, %v600
  %v603 = vxor.u32 %v602, 2147483648
  %v604 = vmul.f32 %v603, 1.442695
  %v605 = vpow.pop %v604
  %v606 = vadd.f32 %v605, 1.0
  %v607 = vrcp.pop %v606
  %v608 = vmul.f32 1.0, %v607
  %v610 = vrot.slane %v602, 2
  %v612 = vtanh.pop %v610
  %v613 = vxor.u32 %v610, 2147483648
  %v614 = vmul.f32 %v613, 1.442695
  %v615 = vpow.pop %v614
  %v616 = vadd.f32 %v615, 1.0
  %v617 = vrcp.pop %v616
  %v618 = vmul.f32 1.0, %v617
  %v619 = vsel %vm29, %v612, %v618
  %v620 = vmul.f32 %v608, %v505
  %v621 = vmul.f32 %v608, %v619
  %623 = vrot.lane.b32.xlu0 %v621, 64
  %v624 = vpop.permute.xlu0 %623
  %v626 = vadd.f32 %v620, %v624
  %v627 = vtanh.pop %v626
  %v628 = vmul.f32 %v619, %v627
  %630 = vrot.lane.b32.xlu0 %v628, 64
  %v631 = vpop.permute.xlu0 %630
  %633 = vst.msk [vmem:[%s514] sm:$0x3] %vm148, %v631
  %634 = vst.msk [vmem:[%s512] sm:$0x3] %vm151, %v631
  %s635 = scalar_lea.vmem %s0, 20
  %v636 = vld [vmem:[%s635] sm:$0xf]
  %v637 = vsel %vm31, %v631, 0
  %639 = vmatprep.subr.mxu0 %v12
  %640 = vmatpush1.msra.mxu0 %v11
  %641 = vmatprep.subr.mxu0 %v14
  %642 = vmatpush1.msra.mxu0 %v13
  %643 = vmatprep.subr.mxu0 %v16
  %644 = vmatpush1.msra.mxu0 %v15
  %645 = vmatprep.subr.mxu0 %v18
  %646 = vmatpush1.msra.mxu0 %v17
  %647 = vmatprep.subr.mxu0 %v20
  %648 = vmatpush1.msra.mxu0 %v19
  %649 = vmatprep.subr.mxu0 %v22
  %650 = vmatpush1.msra.mxu0 %v21
  %651 = vmatprep.subr.mxu0 %v24
  %652 = vmatpush1.msra.mxu0 %v23
  %653 = vmatprep.subr.mxu0 %v26
  %654 = vmatpush1.msra.mxu0 %v25
  %655 = vmatprep.subr.mxu0 0.0
  %656 = vmatpush1.msra.mxu0 0.0
  %657 = vmatprep.subr.mxu0 0.0
  %658 = vmatpush1.msra.mxu0 0.0
  %659 = vmatprep.subr.mxu0 0.0
  %660 = vmatpush1.msra.mxu0 0.0
  %661 = vmatprep.subr.mxu0 0.0
  %662 = vmatpush1.msra.mxu0 0.0
  %663 = vmatprep.subr.mxu0 0.0
  %664 = vmatpush1.msra.mxu0 0.0
  %665 = vmatprep.subr.mxu0 0.0
  %666 = vmatpush1.msra.mxu0 0.0
  %667 = vmatprep.subr.mxu0 0.0
  %668 = vmatpush1.msra.mxu0 0.0
  %669 = vmatprep.subr.mxu0 0.0
  %670 = vmatpush1.msra.mxu0 0.0
  %671 = vmatprep.subr.mxu0 0.0
  %672 = vmatpush1.msra.mxu0 0.0
  %673 = vmatprep.subr.mxu0 0.0
  %674 = vmatpush1.msra.mxu0 0.0
  %675 = vmatprep.subr.mxu0 0.0
  %676 = vmatpush1.msra.mxu0 0.0
  %677 = vmatprep.subr.mxu0 0.0
  %678 = vmatpush1.msra.mxu0 0.0
  %679 = vmatprep.subr.mxu0 0.0
  %680 = vmatpush1.msra.mxu0 0.0
  %681 = vmatprep.subr.mxu0 0.0
  %682 = vmatpush1.msra.mxu0 0.0
  %683 = vmatprep.subr.mxu0 0.0
  %684 = vmatpush1.msra.mxu0 0.0
  %685 = vmatprep.subr.mxu0 0.0
  %686 = vmatpush1.msra.mxu0 0.0
  %687 = vmatprep.subr.mxu0 0.0
  %688 = vmatpush1.msra.mxu0 0.0
  %689 = vmatprep.subr.mxu0 0.0
  %690 = vmatpush1.msra.mxu0 0.0
  %691 = vmatprep.subr.mxu0 0.0
  %692 = vmatpush1.msra.mxu0 0.0
  %693 = vmatprep.subr.mxu0 0.0
  %694 = vmatpush1.msra.mxu0 0.0
  %695 = vmatprep.subr.mxu0 0.0
  %696 = vmatpush1.msra.mxu0 0.0
  %697 = vmatprep.subr.mxu0 0.0
  %698 = vmatpush1.msra.mxu0 0.0
  %699 = vmatprep.subr.mxu0 0.0
  %700 = vmatpush1.msra.mxu0 0.0
  %701 = vmatprep.subr.mxu0 0.0
  %702 = vmatpush1.msra.mxu0 0.0
  %703 = vmatprep.mubr.f32.mxu0 0.0
  %704 = vmatmul.mubr.f32.gmra.mrb[0].mxu0 %v637
  %v705 = vpop.f32.mrb[0].mxu0
  %v706 = vadd.f32 0.0, %v705
  %v707 = vpop.f32.mrb[0].mxu0
  %v708 = vadd.f32 0.0, %v707
  %709 = vdwg.mxu0
  %v712 = vcombine.low %v706, %v708
  %v714 = vunpack.c.l.s4 1983009808
  %v715 = vunpack.c.0.s8 %v714
  %v716 = vlaneseq
  %v717 = vshrl.u32 %v716, 7
  %v718 = vsub.s32 %v715, %v717
  %v719 = vrot.slane %v712, %v718
  %v721 = vadd.f32 %v636, %v719
  %v722 = vxor.u32 %v721, 2147483648
  %v723 = vmul.f32 %v722, 1.442695
  %v724 = vpow.pop %v723
  %v725 = vadd.f32 %v724, 1.0
  %v726 = vrcp.pop %v725
  %v727 = vmul.f32 1.0, %v726
  %v729 = vrot.slane %v721, 2
  %v731 = vtanh.pop %v729
  %v732 = vxor.u32 %v729, 2147483648
  %v733 = vmul.f32 %v732, 1.442695
  %v734 = vpow.pop %v733
  %v735 = vadd.f32 %v734, 1.0
  %v736 = vrcp.pop %v735
  %v737 = vmul.f32 1.0, %v736
  %v738 = vsel %vm29, %v731, %v737
  %v739 = vmul.f32 %v727, %v626
  %v740 = vmul.f32 %v727, %v738
  %742 = vrot.lane.b32.xlu0 %v740, 64
  %v743 = vpop.permute.xlu0 %742
  %v745 = vadd.f32 %v739, %v743
  %v746 = vtanh.pop %v745
  %v747 = vmul.f32 %v738, %v746
  %749 = vrot.lane.b32.xlu0 %v747, 64
  %v750 = vpop.permute.xlu0 %749
  %752 = vst.msk [vmem:[%s393] sm:$0x3] %vm148, %v750
  %753 = vst.msk [vmem:[%s391] sm:$0x3] %vm151, %v750
  %s754 = scalar_lea.vmem %s0, 24
  %v755 = vld [vmem:[%s754] sm:$0xf]
  %v756 = vsel %vm31, %v750, 0
  %758 = vmatprep.subr.mxu0 %v12
  %759 = vmatpush1.msra.mxu0 %v11
  %760 = vmatprep.subr.mxu0 %v14
  %761 = vmatpush1.msra.mxu0 %v13
  %762 = vmatprep.subr.mxu0 %v16
  %763 = vmatpush1.msra.mxu0 %v15
  %764 = vmatprep.subr.mxu0 %v18
  %765 = vmatpush1.msra.mxu0 %v17
  %766 = vmatprep.subr.mxu0 %v20
  %767 = vmatpush1.msra.mxu0 %v19
  %768 = vmatprep.subr.mxu0 %v22
  %769 = vmatpush1.msra.mxu0 %v21
  %770 = vmatprep.subr.mxu0 %v24
  %771 = vmatpush1.msra.mxu0 %v23
  %772 = vmatprep.subr.mxu0 %v26
  %773 = vmatpush1.msra.mxu0 %v25
  %774 = vmatprep.subr.mxu0 0.0
  %775 = vmatpush1.msra.mxu0 0.0
  %776 = vmatprep.subr.mxu0 0.0
  %777 = vmatpush1.msra.mxu0 0.0
  %778 = vmatprep.subr.mxu0 0.0
  %779 = vmatpush1.msra.mxu0 0.0
  %780 = vmatprep.subr.mxu0 0.0
  %781 = vmatpush1.msra.mxu0 0.0
  %782 = vmatprep.subr.mxu0 0.0
  %783 = vmatpush1.msra.mxu0 0.0
  %784 = vmatprep.subr.mxu0 0.0
  %785 = vmatpush1.msra.mxu0 0.0
  %786 = vmatprep.subr.mxu0 0.0
  %787 = vmatpush1.msra.mxu0 0.0
  %788 = vmatprep.subr.mxu0 0.0
  %789 = vmatpush1.msra.mxu0 0.0
  %790 = vmatprep.subr.mxu0 0.0
  %791 = vmatpush1.msra.mxu0 0.0
  %792 = vmatprep.subr.mxu0 0.0
  %793 = vmatpush1.msra.mxu0 0.0
  %794 = vmatprep.subr.mxu0 0.0
  %795 = vmatpush1.msra.mxu0 0.0
  %796 = vmatprep.subr.mxu0 0.0
  %797 = vmatpush1.msra.mxu0 0.0
  %798 = vmatprep.subr.mxu0 0.0
  %799 = vmatpush1.msra.mxu0 0.0
  %800 = vmatprep.subr.mxu0 0.0
  %801 = vmatpush1.msra.mxu0 0.0
  %802 = vmatprep.subr.mxu0 0.0
  %803 = vmatpush1.msra.mxu0 0.0
  %804 = vmatprep.subr.mxu0 0.0
  %805 = vmatpush1.msra.mxu0 0.0
  %806 = vmatprep.subr.mxu0 0.0
  %807 = vmatpush1.msra.mxu0 0.0
  %808 = vmatprep.subr.mxu0 0.0
  %809 = vmatpush1.msra.mxu0 0.0
  %810 = vmatprep.subr.mxu0 0.0
  %811 = vmatpush1.msra.mxu0 0.0
  %812 = vmatprep.subr.mxu0 0.0
  %813 = vmatpush1.msra.mxu0 0.0
  %814 = vmatprep.subr.mxu0 0.0
  %815 = vmatpush1.msra.mxu0 0.0
  %816 = vmatprep.subr.mxu0 0.0
  %817 = vmatpush1.msra.mxu0 0.0
  %818 = vmatprep.subr.mxu0 0.0
  %819 = vmatpush1.msra.mxu0 0.0
  %820 = vmatprep.subr.mxu0 0.0
  %821 = vmatpush1.msra.mxu0 0.0
  %822 = vmatprep.mubr.f32.mxu0 0.0
  %823 = vmatmul.mubr.f32.gmra.mrb[0].mxu0 %v756
  %v824 = vpop.f32.mrb[0].mxu0
  %v825 = vadd.f32 0.0, %v824
  %v826 = vpop.f32.mrb[0].mxu0
  %v827 = vadd.f32 0.0, %v826
  %828 = vdwg.mxu0
  %v831 = vcombine.low %v825, %v827
  %v833 = vunpack.c.l.s4 1983009808
  %v834 = vunpack.c.0.s8 %v833
  %v835 = vlaneseq
  %v836 = vshrl.u32 %v835, 7
  %v837 = vsub.s32 %v834, %v836
  %v838 = vrot.slane %v831, %v837
  %v840 = vadd.f32 %v755, %v838
  %v841 = vxor.u32 %v840, 2147483648
  %v842 = vmul.f32 %v841, 1.442695
  %v843 = vpow.pop %v842
  %v844 = vadd.f32 %v843, 1.0
  %v845 = vrcp.pop %v844
  %v846 = vmul.f32 1.0, %v845
  %v848 = vrot.slane %v840, 2
  %v850 = vtanh.pop %v848
  %v851 = vxor.u32 %v848, 2147483648
  %v852 = vmul.f32 %v851, 1.442695
  %v853 = vpow.pop %v852
  %v854 = vadd.f32 %v853, 1.0
  %v855 = vrcp.pop %v854
  %v856 = vmul.f32 1.0, %v855
  %v857 = vsel %vm29, %v850, %v856
  %v858 = vmul.f32 %v846, %v745
  %v859 = vmul.f32 %v846, %v857
  %861 = vrot.lane.b32.xlu0 %v859, 64
  %v862 = vpop.permute.xlu0 %861
  %v864 = vadd.f32 %v858, %v862
  %v865 = vtanh.pop %v864
  %v866 = vmul.f32 %v857, %v865
  %868 = vrot.lane.b32.xlu0 %v866, 64
  %v869 = vpop.permute.xlu0 %868
  %871 = vst.msk [vmem:[%s272] sm:$0x3] %vm148, %v869
  %872 = vst.msk [vmem:[%s270] sm:$0x3] %vm151, %v869
  %s873 = scalar_lea.vmem %s0, 28
  %v874 = vld [vmem:[%s873] sm:$0xf]
  %v875 = vsel %vm31, %v869, 0
  %877 = vmatprep.subr.mxu0 %v12
  %878 = vmatpush1.msra.mxu0 %v11
  %879 = vmatprep.subr.mxu0 %v14
  %880 = vmatpush1.msra.mxu0 %v13
  %881 = vmatprep.subr.mxu0 %v16
  %882 = vmatpush1.msra.mxu0 %v15
  %883 = vmatprep.subr.mxu0 %v18
  %884 = vmatpush1.msra.mxu0 %v17
  %885 = vmatprep.subr.mxu0 %v20
  %886 = vmatpush1.msra.mxu0 %v19
  %887 = vmatprep.subr.mxu0 %v22
  %888 = vmatpush1.msra.mxu0 %v21
  %889 = vmatprep.subr.mxu0 %v24
  %890 = vmatpush1.msra.mxu0 %v23
  %891 = vmatprep.subr.mxu0 %v26
  %892 = vmatpush1.msra.mxu0 %v25
  %893 = vmatprep.subr.mxu0 0.0
  %894 = vmatpush1.msra.mxu0 0.0
  %895 = vmatprep.subr.mxu0 0.0
  %896 = vmatpush1.msra.mxu0 0.0
  %897 = vmatprep.subr.mxu0 0.0
  %898 = vmatpush1.msra.mxu0 0.0
  %899 = vmatprep.subr.mxu0 0.0
  %900 = vmatpush1.msra.mxu0 0.0
  %901 = vmatprep.subr.mxu0 0.0
  %902 = vmatpush1.msra.mxu0 0.0
  %903 = vmatprep.subr.mxu0 0.0
  %904 = vmatpush1.msra.mxu0 0.0
  %905 = vmatprep.subr.mxu0 0.0
  %906 = vmatpush1.msra.mxu0 0.0
  %907 = vmatprep.subr.mxu0 0.0
  %908 = vmatpush1.msra.mxu0 0.0
  %909 = vmatprep.subr.mxu0 0.0
  %910 = vmatpush1.msra.mxu0 0.0
  %911 = vmatprep.subr.mxu0 0.0
  %912 = vmatpush1.msra.mxu0 0.0
  %913 = vmatprep.subr.mxu0 0.0
  %914 = vmatpush1.msra.mxu0 0.0
  %915 = vmatprep.subr.mxu0 0.0
  %916 = vmatpush1.msra.mxu0 0.0
  %917 = vmatprep.subr.mxu0 0.0
  %918 = vmatpush1.msra.mxu0 0.0
  %919 = vmatprep.subr.mxu0 0.0
  %920 = vmatpush1.msra.mxu0 0.0
  %921 = vmatprep.subr.mxu0 0.0
  %922 = vmatpush1.msra.mxu0 0.0
  %923 = vmatprep.subr.mxu0 0.0
  %924 = vmatpush1.msra.mxu0 0.0
  %925 = vmatprep.subr.mxu0 0.0
  %926 = vmatpush1.msra.mxu0 0.0
  %927 = vmatprep.subr.mxu0 0.0
  %928 = vmatpush1.msra.mxu0 0.0
  %929 = vmatprep.subr.mxu0 0.0
  %930 = vmatpush1.msra.mxu0 0.0
  %931 = vmatprep.subr.mxu0 0.0
  %932 = vmatpush1.msra.mxu0 0.0
  %933 = vmatprep.subr.mxu0 0.0
  %934 = vmatpush1.msra.mxu0 0.0
  %935 = vmatprep.subr.mxu0 0.0
  %936 = vmatpush1.msra.mxu0 0.0
  %937 = vmatprep.subr.mxu0 0.0
  %938 = vmatpush1.msra.mxu0 0.0
  %939 = vmatprep.subr.mxu0 0.0
  %940 = vmatpush1.msra.mxu0 0.0
  %941 = vmatprep.mubr.f32.mxu0 0.0
  %942 = vmatmul.mubr.f32.gmra.mrb[0].mxu0 %v875
  %v943 = vpop.f32.mrb[0].mxu0
  %v944 = vadd.f32 0.0, %v943
  %v945 = vpop.f32.mrb[0].mxu0
  %v946 = vadd.f32 0.0, %v945
  %947 = vdwg.mxu0
  %v950 = vcombine.low %v944, %v946
  %v952 = vunpack.c.l.s4 1983009808
  %v953 = vunpack.c.0.s8 %v952
  %v954 = vlaneseq
  %v955 = vshrl.u32 %v954, 7
  %v956 = vsub.s32 %v953, %v955
  %v957 = vrot.slane %v950, %v956
  %v959 = vadd.f32 %v874, %v957
  %v960 = vxor.u32 %v959, 2147483648
  %v961 = vmul.f32 %v960, 1.442695
  %v962 = vpow.pop %v961
  %v963 = vadd.f32 %v962, 1.0
  %v964 = vrcp.pop %v963
  %v965 = vmul.f32 1.0, %v964
  %v967 = vrot.slane %v959, 2
  %v969 = vtanh.pop %v967
  %v970 = vxor.u32 %v967, 2147483648
  %v971 = vmul.f32 %v970, 1.442695
  %v972 = vpow.pop %v971
  %v973 = vadd.f32 %v972, 1.0
  %v974 = vrcp.pop %v973
  %v975 = vmul.f32 1.0, %v974
  %v976 = vsel %vm29, %v969, %v975
  %v977 = vmul.f32 %v965, %v864
  %v978 = vmul.f32 %v965, %v976
  %980 = vrot.lane.b32.xlu0 %v978, 64
  %v981 = vpop.permute.xlu0 %980
  %v983 = vadd.f32 %v977, %v981
  %v984 = vtanh.pop %v983
  %v985 = vmul.f32 %v976, %v984
  %987 = vrot.lane.b32.xlu0 %v985, 64
  %v988 = vpop.permute.xlu0 %987
  %990 = vst.msk [vmem:[%s150] sm:$0x3] %vm148, %v988
  %991 = vst.msk [vmem:[%s2] sm:$0x3] %vm151, %v988
  // Predicated region
  $region10: #{each_repr_lstm_forward.1} parent=0 // pred_check
    _
  $region11: #{each_repr_lstm_forward.1} parent=0 // pred_check_branch
    %993 = sbr.rel (0) target = $region13
  $region12: #{each_repr_lstm_forward.1} parent=0 // pred_region
    _
  $region13: #{each_repr_lstm_forward.1} parent=0 // pred_fallthru
    _
  // Predicated region
  $region14: #{each_repr_lstm_forward.1} parent=0 // pred_check
    _
  $region15: #{each_repr_lstm_forward.1} parent=0 // pred_check_branch
    %995 = sbr.rel (0) target = $region17
  $region16: #{each_repr_lstm_forward.1} parent=0 // pred_region
    _
  $region17: #{each_repr_lstm_forward.1} parent=0 // pred_fallthru
    _

</llo_original>
